<compile_context>
chip_gen: v7x
topology: tpu7x:2x2x1
jax: 0.10.0
libtpu: 0.0.40
codegen_flags: <defaults>
</compile_context>

<pallas_src>
import functools

import jax
import jax.numpy as jnp
from jax.experimental import pallas as pl
from jax.experimental.pallas import tpu as pltpu

EPS = 1e-5

# Lane-friendly padded widths.
K_PAD = 640          # input 550 -> 640 (5 * 128), zero-padded contraction dim
H1 = 256             # layer-1 width
H2 = 128             # layer-2 width, 64 -> 128 (padded features exactly 0)
H3 = 128             # layer-3 width
OUT_PAD = 512        # output 500 -> 512 (sliced off in the wrapper)


def _bn_train(h, gamma, beta):
    """BatchNorm1d, training-mode (batch) statistics, folded to one FMA.

    var computed as E[h^2] - E[h]^2 so both sublane (XLU) reductions read h
    directly; clamped at 0 to guard against cancellation.  rsqrt -> EUP slot.
    """
    mean = jnp.mean(h, axis=0, keepdims=True)
    msq = jnp.mean(h * h, axis=0, keepdims=True)
    var = jnp.maximum(msq - mean * mean, 0.0)
    scale = gamma * jax.lax.rsqrt(var + EPS)
    return (h - mean) * scale + beta


def mlp_kernel(x_ref, w1_ref, w2_ref, bn_ref, w3_hbm, w4_hbm,
               o_ref, w3_vmem, w4_vmem, sem):
    bf16 = jnp.bfloat16

    # Kick off HBM -> VMEM DMA for the late-layer weights; they only need to
    # land before layer 3 / layer 4, so they overlap with layers 1-2.
    cp3 = pltpu.make_async_copy(w3_hbm, w3_vmem, sem.at[0])
    cp4 = pltpu.make_async_copy(w4_hbm, w4_vmem, sem.at[1])
    cp3.start()
    cp4.start()

    # Packed BN params: rows [g1, b1, g2, b2, g3, b3, g4, b4], 512 lanes each.
    bn = bn_ref[...]

    # Layer 1: Linear(640 -> 256)  [bias cancelled by BN]  + BN + ReLU
    h = jnp.dot(x_ref[...].astype(bf16), w1_ref[...],
                preferred_element_type=jnp.float32)
    h = jnp.maximum(_bn_train(h, bn[0:1, :H1], bn[1:2, :H1]), 0.0)

    # Layer 2: Linear(256 -> 128 padded)  + BN + ReLU  (padded gamma/beta = 0)
    h = jnp.dot(h.astype(bf16), w2_ref[...],
                preferred_element_type=jnp.float32)
    h = jnp.maximum(_bn_train(h, bn[2:3, :H2], bn[3:4, :H2]), 0.0)

    # Layer 3: Linear(128 -> 128)  + BN + ReLU  (zero-padded input rows -> exact)
    cp3.wait()
    h = jnp.dot(h.astype(bf16), w3_vmem[...],
                preferred_element_type=jnp.float32)
    h = jnp.maximum(_bn_train(h, bn[4:5, :H3], bn[5:6, :H3]), 0.0)

    # Layer 4: Linear(128 -> 512 padded)  + BN + Sigmoid
    cp4.wait()
    h = jnp.dot(h.astype(bf16), w4_vmem[...],
                preferred_element_type=jnp.float32)
    h = _bn_train(h, bn[6:7, :OUT_PAD], bn[7:8, :OUT_PAD])
    o_ref[...] = jax.nn.sigmoid(h)


@functools.partial(jax.jit, static_argnames=("output_dim",))
def global_dnn_9lifi_forward(x, kernel_params, output_dim=500):
    """x: (B, 550) float32; kernel_params = prepare_params(...) -> (B, output_dim)."""
    B, in_dim = x.shape
    w1, w2, w3, w4, bn = kernel_params
    out_pad = w4.shape[1]

    # K-pad x with zero columns to match w1's zero-padded rows (exact).
    x_pad = x if in_dim == K_PAD else jnp.pad(x, ((0, 0), (0, K_PAD - in_dim)))

    # Cost / VMEM bookkeeping (all static at trace time).
    flops = 2 * B * (w1.shape[0] * w1.shape[1] + w2.shape[0] * w2.shape[1]
                     + w3.shape[0] * w3.shape[1] + w4.shape[0] * w4.shape[1])
    transcendentals = B * out_pad + (w1.shape[1] + w2.shape[1]
                                     + w3.shape[1] + w4.shape[1])
    param_bytes = sum(int(p.size) * p.dtype.itemsize for p in kernel_params)
    x_bytes = B * K_PAD * 4
    out_bytes = B * out_pad * 4
    act_bytes = B * (K_PAD + w1.shape[1] + w2.shape[1] + w3.shape[1] + out_pad) * 4

    # Clamp the VMEM limit per generation (v7x has 64 MiB/TC).
    try:
        vmem_cap = int(pltpu.get_tpu_info().vmem_capacity_bytes)
    except Exception:  # pragma: no cover - conservative fallback
        vmem_cap = 64 * 1024 * 1024
    vmem_limit = int(min(3 * vmem_cap // 4,
                         4 * 1024 * 1024
                         + 2 * (param_bytes + x_bytes + out_bytes)
                         + 4 * act_bytes))

    vmem_spec = pl.BlockSpec(memory_space=pltpu.MemorySpace.VMEM)
    hbm_spec = pl.BlockSpec(memory_space=pl.ANY)

    out = pl.pallas_call(
        mlp_kernel,
        out_shape=jax.ShapeDtypeStruct((B, out_pad), jnp.float32),
        in_specs=[vmem_spec,            # x
                  vmem_spec,            # w1
                  vmem_spec,            # w2
                  vmem_spec,            # packed BN params
                  hbm_spec,             # w3 (manual DMA)
                  hbm_spec],            # w4 (manual DMA)
        out_specs=vmem_spec,
        scratch_shapes=[pltpu.VMEM(tuple(w3.shape), w3.dtype),
                        pltpu.VMEM(tuple(w4.shape), w4.dtype),
                        pltpu.SemaphoreType.DMA((2,))],
        compiler_params=pltpu.CompilerParams(vmem_limit_bytes=vmem_limit),
        cost_estimate=pl.CostEstimate(
            flops=int(flops),
            transcendentals=int(transcendentals),
            bytes_accessed=int(param_bytes + x_bytes + out_bytes)),
    )(x_pad, w1, w2, bn, w3, w4)

    # Module semantics: (B, output_dim).  (Consumers that can take the padded
    # (B, 512) slab could skip this slice.)
    return out[:, :output_dim]


# ----------------------------------------------------------------------------
# Parameter construction / preparation
# ----------------------------------------------------------------------------

def init_params(key, input_dim=550, output_dim=500):
    """PyTorch-style params (f32): per layer [W (in,out), b (1,out), gamma, beta]."""
    dims = [input_dim, 256, 64, 128, output_dim]
    params = []
    keys = jax.random.split(key, 8)
    for i in range(4):
        fan_in, fan_out = dims[i], dims[i + 1]
        bound = 1.0 / jnp.sqrt(jnp.float32(fan_in))
        w = jax.random.uniform(keys[2 * i], (fan_in, fan_out),
                               minval=-bound, maxval=bound, dtype=jnp.float32)
        b = jax.random.uniform(keys[2 * i + 1], (1, fan_out),
                               minval=-bound, maxval=bound, dtype=jnp.float32)
        gamma = jnp.ones((1, fan_out), jnp.float32)
        beta = jnp.zeros((1, fan_out), jnp.float32)
        params += [w, b, gamma, beta]
    return params


def _pad_cols(a, n):
    return a if a.shape[1] == n else jnp.pad(a, ((0, 0), (0, n - a.shape[1])))


def _pad_rows(a, n):
    return a if a.shape[0] == n else jnp.pad(a, ((0, n - a.shape[0]), (0, 0)))


def prepare_params(params):
    """Pad to lane-friendly widths, drop Linear biases (exactly cancelled by the
    training-mode BN mean subtraction), cast weights to bf16, and pack all BN
    gammas/betas into one (8, 512) f32 array."""
    (w1, _b1, g1, be1,
     w2, _b2, g2, be2,
     w3, _b3, g3, be3,
     w4, _b4, g4, be4) = params

    bf = lambda a: a.astype(jnp.bfloat16)

    w1p = _pad_rows(w1, K_PAD)              # zero K rows (exact; x is K-padded too)
    w2p = _pad_cols(w2, H2)                 # 64 -> 128 out feats (gamma/beta = 0)
    w3p = _pad_rows(w3, H2)                 # zero input rows (padded feats are 0)
    w4p = _pad_cols(w4, OUT_PAD)            # 500 -> 512 out feats (sliced off)

    bn = jnp.concatenate(
        [_pad_cols(g1, OUT_PAD), _pad_cols(be1, OUT_PAD),
         _pad_cols(g2, OUT_PAD), _pad_cols(be2, OUT_PAD),
         _pad_cols(g3, OUT_PAD), _pad_cols(be3, OUT_PAD),
         _pad_cols(g4, OUT_PAD), _pad_cols(be4, OUT_PAD)],
        axis=0).astype(jnp.float32)         # (8, 512), one DMA descriptor

    return [bf(w1p), bf(w2p), bf(w3p), bf(w4p), bn]


# ----------------------------------------------------------------------------
# References
# ----------------------------------------------------------------------------

def reference_forward_f32(x, params):
    """Faithful f32 reference of the PyTorch module (with biases, unpadded)."""
    h = x
    for i in range(4):
        w, b, g, be = params[4 * i:4 * i + 4]
        h = h @ w + b
        mean = jnp.mean(h, axis=0, keepdims=True)
        var = jnp.mean((h - mean) ** 2, axis=0, keepdims=True)
        h = (h - mean) * jax.lax.rsqrt(var + EPS) * g + be
        h = jnp.maximum(h, 0.0) if i < 3 else jax.nn.sigmoid(h)
    return h


def reference_forward_matched(x, kernel_params, output_dim=500):
    """Pure-JAX reference doing the identical padded / bf16 / folded-BN math."""
    w1, w2, w3, w4, bn = kernel_params
    widths = (H1, H2, H3, OUT_PAD)
    h = jnp.pad(x, ((0, 0), (0, K_PAD - x.shape[1]))) if x.shape[1] != K_PAD else x
    for i, w in enumerate((w1, w2, w3, w4)):
        g = bn[2 * i:2 * i + 1, :widths[i]]
        be = bn[2 * i + 1:2 * i + 2, :widths[i]]
        h = jnp.dot(h.astype(jnp.bfloat16), w, preferred_element_type=jnp.float32)
        h = _bn_train(h, g, be)
        h = jnp.maximum(h, 0.0) if i < 3 else jax.nn.sigmoid(h)
    return h[:, :output_dim]


if __name__ == "__main__":
    key = jax.random.PRNGKey(0)
    k_x, k_p = jax.random.split(key)

    B, INPUT_DIM, OUTPUT_DIM = 8, 550, 500
    x = jax.random.normal(k_x, (B, INPUT_DIM), dtype=jnp.float32)
    params = init_params(k_p, INPUT_DIM, OUTPUT_DIM)
    kparams = prepare_params(params)

    out = jax.block_until_ready(global_dnn_9lifi_forward(x, kparams, OUTPUT_DIM))
    assert out.shape == (B, OUTPUT_DIM)

    # Tight check against a pure-JAX reference doing the identical math.
    ref_matched = jax.block_until_ready(
        reference_forward_matched(x, kparams, OUTPUT_DIM))
    assert jnp.allclose(out, ref_matched, atol=1e-3, rtol=1e-3), \
        "mismatch vs matched reference"

    # Loose check against the full-f32 PyTorch-equivalent math (bf16 weights
    # introduce small quantization error; sigmoid outputs are in [0, 1]).
    ref_f32 = jax.block_until_ready(reference_forward_f32(x, params))
    assert jnp.allclose(out, ref_f32, atol=5e-2), "mismatch vs f32 reference"

    print("KERNEL_OK")
</pallas_src>

<mosaic_0001>
module attributes {stable_mosaic.version = 11 : i64} {
  func.func @mlp_kernel(%arg0: memref<8x640xf32, #tpu.memory_space<vmem>>, %arg1: memref<640x256xbf16, #tpu.memory_space<vmem>>, %arg2: memref<256x128xbf16, #tpu.memory_space<vmem>>, %arg3: memref<8x512xf32, #tpu.memory_space<vmem>>, %arg4: memref<128x128xbf16, #tpu.memory_space<any>>, %arg5: memref<128x512xbf16, #tpu.memory_space<any>>, %arg6: memref<8x512xf32, #tpu.memory_space<vmem>>, %arg7: memref<128x128xbf16, #tpu.memory_space<vmem>>, %arg8: memref<128x512xbf16, #tpu.memory_space<vmem>>, %arg9: memref<2x!tpu.dma_semaphore, #tpu.memory_space<semaphore_mem>>) attributes {dimension_semantics = [], scalar_prefetch = 0 : i64, scratch_operands = 3 : i64, tpu.core_type = #tpu.core_type<tc>} {
    %c0_i32 = arith.constant 0 : i32
    %0 = tpu.memref_slice %arg9[%c0_i32] : memref<2x!tpu.dma_semaphore, #tpu.memory_space<semaphore_mem>> -> memref<1x!tpu.dma_semaphore, #tpu.memory_space<semaphore_mem>>
    %1 = tpu.memref_squeeze %0 : memref<1x!tpu.dma_semaphore, #tpu.memory_space<semaphore_mem>> -> memref<!tpu.dma_semaphore, #tpu.memory_space<semaphore_mem>>
    tpu.enqueue_dma source(%arg4 : memref<128x128xbf16, #tpu.memory_space<any>>) target(%arg7 : memref<128x128xbf16, #tpu.memory_space<vmem>>) target_semaphore(%1 : memref<!tpu.dma_semaphore, #tpu.memory_space<semaphore_mem>>)
    %c1_i32 = arith.constant 1 : i32
    %2 = tpu.memref_slice %arg9[%c1_i32] : memref<2x!tpu.dma_semaphore, #tpu.memory_space<semaphore_mem>> -> memref<1x!tpu.dma_semaphore, #tpu.memory_space<semaphore_mem>>
    %3 = tpu.memref_squeeze %2 : memref<1x!tpu.dma_semaphore, #tpu.memory_space<semaphore_mem>> -> memref<!tpu.dma_semaphore, #tpu.memory_space<semaphore_mem>>
    tpu.enqueue_dma source(%arg5 : memref<128x512xbf16, #tpu.memory_space<any>>) target(%arg8 : memref<128x512xbf16, #tpu.memory_space<vmem>>) target_semaphore(%3 : memref<!tpu.dma_semaphore, #tpu.memory_space<semaphore_mem>>)
    %c0 = arith.constant 0 : index
    %c0_0 = arith.constant 0 : index
    %4 = vector.load %arg3[%c0, %c0_0] : memref<8x512xf32, #tpu.memory_space<vmem>>, vector<8x512xf32>
    %c0_1 = arith.constant 0 : index
    %c0_2 = arith.constant 0 : index
    %5 = vector.load %arg0[%c0_1, %c0_2] : memref<8x640xf32, #tpu.memory_space<vmem>>, vector<8x640xf32>
    %6 = arith.truncf %5 : vector<8x640xf32> to vector<8x640xbf16>
    %c0_3 = arith.constant 0 : index
    %c0_4 = arith.constant 0 : index
    %7 = vector.load %arg1[%c0_3, %c0_4] : memref<640x256xbf16, #tpu.memory_space<vmem>>, vector<640x256xbf16>
    %cst = arith.constant dense<0.000000e+00> : vector<8x256xf32>
    %8 = tpu.matmul %6, %7, %cst {dimension_numbers = #tpu.dot_dimension_numbers<[1], [0], [0], [1], [0, 0, 1, 1], [], []>} : vector<8x640xbf16>, vector<640x256xbf16>, vector<8x256xf32> -> vector<8x256xf32>
    %9 = vector.extract_strided_slice %4 {offsets = [0, 0], sizes = [1, 256], strides = [1, 1]} : vector<8x512xf32> to vector<1x256xf32>
    %10 = vector.extract_strided_slice %4 {offsets = [1, 0], sizes = [1, 256], strides = [1, 1]} : vector<8x512xf32> to vector<1x256xf32>
    %cst_5 = arith.constant dense<0.000000e+00> : vector<256xf32>
    %11 = vector.multi_reduction <add>, %8, %cst_5 [0] : vector<8x256xf32> to vector<256xf32>
    %12 = vector.shape_cast %11 : vector<256xf32> to vector<1x256xf32>
    %cst_6 = arith.constant 8.000000e+00 : f32
    %13 = vector.broadcast %cst_6 : f32 to vector<1x256xf32>
    %14 = arith.divf %12, %13 : vector<1x256xf32>
    %15 = arith.mulf %8, %8 : vector<8x256xf32>
    %cst_7 = arith.constant dense<0.000000e+00> : vector<256xf32>
    %16 = vector.multi_reduction <add>, %15, %cst_7 [0] : vector<8x256xf32> to vector<256xf32>
    %17 = vector.shape_cast %16 : vector<256xf32> to vector<1x256xf32>
    %cst_8 = arith.constant 8.000000e+00 : f32
    %18 = vector.broadcast %cst_8 : f32 to vector<1x256xf32>
    %19 = arith.divf %17, %18 : vector<1x256xf32>
    %20 = arith.mulf %14, %14 : vector<1x256xf32>
    %21 = arith.subf %19, %20 : vector<1x256xf32>
    %cst_9 = arith.constant 0.000000e+00 : f32
    %22 = vector.broadcast %cst_9 : f32 to vector<1x256xf32>
    %23 = arith.maximumf %21, %22 : vector<1x256xf32>
    %cst_10 = arith.constant 9.99999974E-6 : f32
    %24 = vector.broadcast %cst_10 : f32 to vector<1x256xf32>
    %25 = arith.addf %23, %24 : vector<1x256xf32>
    %26 = math.rsqrt %25 : vector<1x256xf32>
    %27 = arith.mulf %9, %26 : vector<1x256xf32>
    %28 = vector.broadcast %14 : vector<1x256xf32> to vector<8x256xf32>
    %29 = arith.subf %8, %28 : vector<8x256xf32>
    %30 = vector.broadcast %27 : vector<1x256xf32> to vector<8x256xf32>
    %31 = arith.mulf %29, %30 : vector<8x256xf32>
    %32 = vector.broadcast %10 : vector<1x256xf32> to vector<8x256xf32>
    %33 = arith.addf %31, %32 : vector<8x256xf32>
    %cst_11 = arith.constant 0.000000e+00 : f32
    %34 = vector.broadcast %cst_11 : f32 to vector<8x256xf32>
    %35 = arith.maximumf %33, %34 : vector<8x256xf32>
    %36 = arith.truncf %35 : vector<8x256xf32> to vector<8x256xbf16>
    %c0_12 = arith.constant 0 : index
    %c0_13 = arith.constant 0 : index
    %37 = vector.load %arg2[%c0_12, %c0_13] : memref<256x128xbf16, #tpu.memory_space<vmem>>, vector<256x128xbf16>
    %cst_14 = arith.constant dense<0.000000e+00> : vector<8x128xf32>
    %38 = tpu.matmul %36, %37, %cst_14 {dimension_numbers = #tpu.dot_dimension_numbers<[1], [0], [0], [1], [0, 0, 1, 1], [], []>} : vector<8x256xbf16>, vector<256x128xbf16>, vector<8x128xf32> -> vector<8x128xf32>
    %39 = vector.extract_strided_slice %4 {offsets = [2, 0], sizes = [1, 128], strides = [1, 1]} : vector<8x512xf32> to vector<1x128xf32>
    %40 = vector.extract_strided_slice %4 {offsets = [3, 0], sizes = [1, 128], strides = [1, 1]} : vector<8x512xf32> to vector<1x128xf32>
    %cst_15 = arith.constant dense<0.000000e+00> : vector<128xf32>
    %41 = vector.multi_reduction <add>, %38, %cst_15 [0] : vector<8x128xf32> to vector<128xf32>
    %42 = vector.shape_cast %41 : vector<128xf32> to vector<1x128xf32>
    %cst_16 = arith.constant 8.000000e+00 : f32
    %43 = vector.broadcast %cst_16 : f32 to vector<1x128xf32>
    %44 = arith.divf %42, %43 : vector<1x128xf32>
    %45 = arith.mulf %38, %38 : vector<8x128xf32>
    %cst_17 = arith.constant dense<0.000000e+00> : vector<128xf32>
    %46 = vector.multi_reduction <add>, %45, %cst_17 [0] : vector<8x128xf32> to vector<128xf32>
    %47 = vector.shape_cast %46 : vector<128xf32> to vector<1x128xf32>
    %cst_18 = arith.constant 8.000000e+00 : f32
    %48 = vector.broadcast %cst_18 : f32 to vector<1x128xf32>
    %49 = arith.divf %47, %48 : vector<1x128xf32>
    %50 = arith.mulf %44, %44 : vector<1x128xf32>
    %51 = arith.subf %49, %50 : vector<1x128xf32>
    %cst_19 = arith.constant 0.000000e+00 : f32
    %52 = vector.broadcast %cst_19 : f32 to vector<1x128xf32>
    %53 = arith.maximumf %51, %52 : vector<1x128xf32>
    %cst_20 = arith.constant 9.99999974E-6 : f32
    %54 = vector.broadcast %cst_20 : f32 to vector<1x128xf32>
    %55 = arith.addf %53, %54 : vector<1x128xf32>
    %56 = math.rsqrt %55 : vector<1x128xf32>
    %57 = arith.mulf %39, %56 : vector<1x128xf32>
    %58 = vector.broadcast %44 : vector<1x128xf32> to vector<8x128xf32>
    %59 = arith.subf %38, %58 : vector<8x128xf32>
    %60 = vector.broadcast %57 : vector<1x128xf32> to vector<8x128xf32>
    %61 = arith.mulf %59, %60 : vector<8x128xf32>
    %62 = vector.broadcast %40 : vector<1x128xf32> to vector<8x128xf32>
    %63 = arith.addf %61, %62 : vector<8x128xf32>
    %cst_21 = arith.constant 0.000000e+00 : f32
    %64 = vector.broadcast %cst_21 : f32 to vector<8x128xf32>
    %65 = arith.maximumf %63, %64 : vector<8x128xf32>
    %c0_i32_22 = arith.constant 0 : i32
    %66 = tpu.memref_slice %arg9[%c0_i32_22] : memref<2x!tpu.dma_semaphore, #tpu.memory_space<semaphore_mem>> -> memref<1x!tpu.dma_semaphore, #tpu.memory_space<semaphore_mem>>
    %67 = tpu.memref_squeeze %66 : memref<1x!tpu.dma_semaphore, #tpu.memory_space<semaphore_mem>> -> memref<!tpu.dma_semaphore, #tpu.memory_space<semaphore_mem>>
    tpu.wait_dma2 semaphore(%67 : memref<!tpu.dma_semaphore, #tpu.memory_space<semaphore_mem>>) src(%arg4 : memref<128x128xbf16, #tpu.memory_space<any>>) dst(%arg7 : memref<128x128xbf16, #tpu.memory_space<vmem>>)
    %68 = arith.truncf %65 : vector<8x128xf32> to vector<8x128xbf16>
    %c0_23 = arith.constant 0 : index
    %c0_24 = arith.constant 0 : index
    %69 = vector.load %arg7[%c0_23, %c0_24] : memref<128x128xbf16, #tpu.memory_space<vmem>>, vector<128x128xbf16>
    %cst_25 = arith.constant dense<0.000000e+00> : vector<8x128xf32>
    %70 = tpu.matmul %68, %69, %cst_25 {dimension_numbers = #tpu.dot_dimension_numbers<[1], [0], [0], [1], [0, 0, 1, 1], [], []>} : vector<8x128xbf16>, vector<128x128xbf16>, vector<8x128xf32> -> vector<8x128xf32>
    %71 = vector.extract_strided_slice %4 {offsets = [4, 0], sizes = [1, 128], strides = [1, 1]} : vector<8x512xf32> to vector<1x128xf32>
    %72 = vector.extract_strided_slice %4 {offsets = [5, 0], sizes = [1, 128], strides = [1, 1]} : vector<8x512xf32> to vector<1x128xf32>
    %cst_26 = arith.constant dense<0.000000e+00> : vector<128xf32>
    %73 = vector.multi_reduction <add>, %70, %cst_26 [0] : vector<8x128xf32> to vector<128xf32>
    %74 = vector.shape_cast %73 : vector<128xf32> to vector<1x128xf32>
    %cst_27 = arith.constant 8.000000e+00 : f32
    %75 = vector.broadcast %cst_27 : f32 to vector<1x128xf32>
    %76 = arith.divf %74, %75 : vector<1x128xf32>
    %77 = arith.mulf %70, %70 : vector<8x128xf32>
    %cst_28 = arith.constant dense<0.000000e+00> : vector<128xf32>
    %78 = vector.multi_reduction <add>, %77, %cst_28 [0] : vector<8x128xf32> to vector<128xf32>
    %79 = vector.shape_cast %78 : vector<128xf32> to vector<1x128xf32>
    %cst_29 = arith.constant 8.000000e+00 : f32
    %80 = vector.broadcast %cst_29 : f32 to vector<1x128xf32>
    %81 = arith.divf %79, %80 : vector<1x128xf32>
    %82 = arith.mulf %76, %76 : vector<1x128xf32>
    %83 = arith.subf %81, %82 : vector<1x128xf32>
    %cst_30 = arith.constant 0.000000e+00 : f32
    %84 = vector.broadcast %cst_30 : f32 to vector<1x128xf32>
    %85 = arith.maximumf %83, %84 : vector<1x128xf32>
    %cst_31 = arith.constant 9.99999974E-6 : f32
    %86 = vector.broadcast %cst_31 : f32 to vector<1x128xf32>
    %87 = arith.addf %85, %86 : vector<1x128xf32>
    %88 = math.rsqrt %87 : vector<1x128xf32>
    %89 = arith.mulf %71, %88 : vector<1x128xf32>
    %90 = vector.broadcast %76 : vector<1x128xf32> to vector<8x128xf32>
    %91 = arith.subf %70, %90 : vector<8x128xf32>
    %92 = vector.broadcast %89 : vector<1x128xf32> to vector<8x128xf32>
    %93 = arith.mulf %91, %92 : vector<8x128xf32>
    %94 = vector.broadcast %72 : vector<1x128xf32> to vector<8x128xf32>
    %95 = arith.addf %93, %94 : vector<8x128xf32>
    %cst_32 = arith.constant 0.000000e+00 : f32
    %96 = vector.broadcast %cst_32 : f32 to vector<8x128xf32>
    %97 = arith.maximumf %95, %96 : vector<8x128xf32>
    %c1_i32_33 = arith.constant 1 : i32
    %98 = tpu.memref_slice %arg9[%c1_i32_33] : memref<2x!tpu.dma_semaphore, #tpu.memory_space<semaphore_mem>> -> memref<1x!tpu.dma_semaphore, #tpu.memory_space<semaphore_mem>>
    %99 = tpu.memref_squeeze %98 : memref<1x!tpu.dma_semaphore, #tpu.memory_space<semaphore_mem>> -> memref<!tpu.dma_semaphore, #tpu.memory_space<semaphore_mem>>
    tpu.wait_dma2 semaphore(%99 : memref<!tpu.dma_semaphore, #tpu.memory_space<semaphore_mem>>) src(%arg5 : memref<128x512xbf16, #tpu.memory_space<any>>) dst(%arg8 : memref<128x512xbf16, #tpu.memory_space<vmem>>)
    %100 = arith.truncf %97 : vector<8x128xf32> to vector<8x128xbf16>
    %c0_34 = arith.constant 0 : index
    %c0_35 = arith.constant 0 : index
    %101 = vector.load %arg8[%c0_34, %c0_35] : memref<128x512xbf16, #tpu.memory_space<vmem>>, vector<128x512xbf16>
    %cst_36 = arith.constant dense<0.000000e+00> : vector<8x512xf32>
    %102 = tpu.matmul %100, %101, %cst_36 {dimension_numbers = #tpu.dot_dimension_numbers<[1], [0], [0], [1], [0, 0, 1, 1], [], []>} : vector<8x128xbf16>, vector<128x512xbf16>, vector<8x512xf32> -> vector<8x512xf32>
    %103 = vector.extract_strided_slice %4 {offsets = [6, 0], sizes = [1, 512], strides = [1, 1]} : vector<8x512xf32> to vector<1x512xf32>
    %104 = vector.extract_strided_slice %4 {offsets = [7, 0], sizes = [1, 512], strides = [1, 1]} : vector<8x512xf32> to vector<1x512xf32>
    %cst_37 = arith.constant dense<0.000000e+00> : vector<512xf32>
    %105 = vector.multi_reduction <add>, %102, %cst_37 [0] : vector<8x512xf32> to vector<512xf32>
    %106 = vector.shape_cast %105 : vector<512xf32> to vector<1x512xf32>
    %cst_38 = arith.constant 8.000000e+00 : f32
    %107 = vector.broadcast %cst_38 : f32 to vector<1x512xf32>
    %108 = arith.divf %106, %107 : vector<1x512xf32>
    %109 = arith.mulf %102, %102 : vector<8x512xf32>
    %cst_39 = arith.constant dense<0.000000e+00> : vector<512xf32>
    %110 = vector.multi_reduction <add>, %109, %cst_39 [0] : vector<8x512xf32> to vector<512xf32>
    %111 = vector.shape_cast %110 : vector<512xf32> to vector<1x512xf32>
    %cst_40 = arith.constant 8.000000e+00 : f32
    %112 = vector.broadcast %cst_40 : f32 to vector<1x512xf32>
    %113 = arith.divf %111, %112 : vector<1x512xf32>
    %114 = arith.mulf %108, %108 : vector<1x512xf32>
    %115 = arith.subf %113, %114 : vector<1x512xf32>
    %cst_41 = arith.constant 0.000000e+00 : f32
    %116 = vector.broadcast %cst_41 : f32 to vector<1x512xf32>
    %117 = arith.maximumf %115, %116 : vector<1x512xf32>
    %cst_42 = arith.constant 9.99999974E-6 : f32
    %118 = vector.broadcast %cst_42 : f32 to vector<1x512xf32>
    %119 = arith.addf %117, %118 : vector<1x512xf32>
    %120 = math.rsqrt %119 : vector<1x512xf32>
    %121 = arith.mulf %103, %120 : vector<1x512xf32>
    %122 = vector.broadcast %108 : vector<1x512xf32> to vector<8x512xf32>
    %123 = arith.subf %102, %122 : vector<8x512xf32>
    %124 = vector.broadcast %121 : vector<1x512xf32> to vector<8x512xf32>
    %125 = arith.mulf %123, %124 : vector<8x512xf32>
    %126 = vector.broadcast %104 : vector<1x512xf32> to vector<8x512xf32>
    %127 = arith.addf %125, %126 : vector<8x512xf32>
    %128 = arith.negf %127 : vector<8x512xf32>
    %129 = math.exp %128 : vector<8x512xf32>
    %cst_43 = arith.constant 1.000000e+00 : f32
    %130 = vector.broadcast %cst_43 : f32 to vector<8x512xf32>
    %131 = arith.addf %130, %129 : vector<8x512xf32>
    %132 = arith.divf %130, %131 : vector<8x512xf32>
    %c0_44 = arith.constant 0 : index
    %c0_45 = arith.constant 0 : index
    %133 = vector.load %arg6[%c0_44, %c0_45] : memref<8x512xf32, #tpu.memory_space<vmem>>, vector<8x512xf32>
    tpu.vector_store %arg6[%c0_44, %c0_45], %132 {strides = array<i32>} : memref<8x512xf32, #tpu.memory_space<vmem>>, vector<8x512xf32>,
    return
  }
}

</mosaic_0001>

<llo_original>
// kernel: global_dnn_9lifi_forward.1
$region0: #{global_dnn_9lifi_forward.1}
  #allocation0 [shape = 'u32[]', space=smem, size = 0x4, offset = 0x4, fixed_abs, tag = 'smem constant byte address 0x4 - core index']
  #allocation1 [shape = 'u32[144,128]{1,0:T(1,128)}', space=vmem, size = 0x12000, scoped, tag = 'internal scratch']
  #allocation2 [shape = 'bf16[128,128]{1,0:T(16,128)(2,1)}', space=vmem, size = 0x8000, scoped, tag = 'scratch operand']
  #allocation3 [shape = 'bf16[128,512]{1,0:T(16,128)(2,1)}', space=vmem, size = 0x20000, scoped, tag = 'scratch operand']
  #allocation4 [shape = 's32[2]{0}', space=sflag, size = 0x8, scoped, tag = 'scratch operand']
  #allocation11 [shape = 's32[]', space=sflag, size = 0x4, offset = 0, fixed_abs, tag = 'sflag constant byte address 0x0 - dummy sync flag']
  #allocation12 [shape = 's32[]', space=sflag, size = 0x4, offset = 0, fixed_abs, tag = 'sflag constant byte address 0x0 - dummy sync flag']
  %s0 = inlined_call_operand.vmem [shape: f32[8,640], index: 0, kind: input, shape index: {}]
  %s1 = inlined_call_operand.hbm [shape: bf16[640,256], index: 1, kind: input, shape index: {}]
  %s2 = inlined_call_operand.hbm [shape: bf16[256,128], index: 2, kind: input, shape index: {}]
  %s3 = inlined_call_operand.vmem [shape: f32[8,512], index: 3, kind: input, shape index: {}]
  %s4 = inlined_call_operand.vmem [shape: bf16[128,128], index: 4, kind: input, shape index: {}]
  %s5 = inlined_call_operand.hbm [shape: bf16[128,512], index: 5, kind: input, shape index: {}]
  %s6 = inlined_call_operand.hbm [shape: f32[8,512], index: 6, kind: output, shape index: {}]
  %s7 = sld [smem:[#allocation0]]
  $region68: #{global_dnn_9lifi_forward.1} parent=0
    _
  %s9 = ssub.s32 1, %s7
  %s10 = scalar_select 0, %s9, %s7
  $region1: #{global_dnn_9lifi_forward.1} parent=0
    #allocation5 [shape = 'u8[327680]{0}', space=vmem, size = 0x50000, scoped, tag = 'input window, operand 1, single buffered']
    #allocation6 [shape = 's32[1]{0}', space=sflag, size = 0x4, scoped, tag = 'scoped memory for global_dnn_9lifi_forward.1']
    #allocation7 [shape = 's32[1]{0}', space=sflag, size = 0x4, scoped, tag = 'scoped memory for global_dnn_9lifi_forward.1']
    #allocation8 [shape = 'u8[65536]{0}', space=vmem, size = 0x10000, scoped, tag = 'input window, operand 2, single buffered']
    #allocation9 [shape = 's32[1]{0}', space=sflag, size = 0x4, scoped, tag = 'scoped memory for global_dnn_9lifi_forward.1']
    #allocation10 [shape = 'u8[16384]{0}', space=vmem, size = 0x4000, scoped, tag = 'output window, operand 0, single buffered']
    #allocation13 [shape = 'u32[9]{0}', space=smem, size = 0x24, scoped, tag = 'DMA stride descriptor']
    %11 = vsyncpa [#allocation6], 0
    %12 = vsyncpa [#allocation9], 0
    %13 = vsyncpa [#allocation7], 0
    // Predicated region
    $region2: #{global_dnn_9lifi_forward.1} parent=1 // pred_check
      _
    $region3: #{global_dnn_9lifi_forward.1} parent=1 // pred_check_branch
      %15 = sbr.rel (0) target = $region5
    $region4: #{global_dnn_9lifi_forward.1} parent=1 // pred_region
      _
    $region5: #{global_dnn_9lifi_forward.1} parent=1 // pred_fallthru
      _
    // Predicated region
    $region6: #{global_dnn_9lifi_forward.1} parent=1 // pred_check
      _
    $region7: #{global_dnn_9lifi_forward.1} parent=1 // pred_check_branch
      %17 = sbr.rel (0) target = $region9
    $region8: #{global_dnn_9lifi_forward.1} parent=1 // pred_region
      %s19 = ssub.s32 10240, 10240
      %20 = vsyncadd [#allocation6], %s19
      %s21 = sshll.u32 [#allocation5], 4
      %s22 = int_to_ptr.vmem [resolvable:$true] %s21
      %27 = dma.hbm_to_vmem [thread:$0]  %s1, 10240, %s22, [#allocation6], 128, 128, 8
    $region9: #{global_dnn_9lifi_forward.1} parent=1 // pred_fallthru
      _
    // Predicated region
    $region10: #{global_dnn_9lifi_forward.1} parent=1 // pred_check
      _
    $region11: #{global_dnn_9lifi_forward.1} parent=1 // pred_check_branch
      %29 = sbr.rel (0) target = $region13
    $region12: #{global_dnn_9lifi_forward.1} parent=1 // pred_region
      %s31 = ssub.s32 2048, 2048
      %32 = vsyncadd [#allocation9], %s31
      %s33 = sshll.u32 [#allocation8], 4
      %s34 = int_to_ptr.vmem [resolvable:$true] %s33
      %39 = dma.hbm_to_vmem [thread:$0]  %s2, 2048, %s34, [#allocation9], 64, 64, 4
    $region13: #{global_dnn_9lifi_forward.1} parent=1 // pred_fallthru
      _
    // Predicated region
    $region14: #{global_dnn_9lifi_forward.1} parent=1 // pred_check
      _
    $region15: #{global_dnn_9lifi_forward.1} parent=1 // pred_check_branch
      %41 = sbr.rel (0) target = $region17
    $region16: #{global_dnn_9lifi_forward.1} parent=1 // pred_region
      _
    $region17: #{global_dnn_9lifi_forward.1} parent=1 // pred_fallthru
      _
    // Predicated region
    $region18: #{global_dnn_9lifi_forward.1} parent=1 // pred_check
      _
    $region19: #{global_dnn_9lifi_forward.1} parent=1 // pred_check_branch
      %43 = sbr.rel (0) target = $region21
    $region20: #{global_dnn_9lifi_forward.1} parent=1 // pred_region
      %44 = dma.done [#allocation6], 10240
    $region21: #{global_dnn_9lifi_forward.1} parent=1 // pred_fallthru
      _
    // Predicated region
    $region22: #{global_dnn_9lifi_forward.1} parent=1 // pred_check
      _
    $region23: #{global_dnn_9lifi_forward.1} parent=1 // pred_check_branch
      %46 = sbr.rel (0) target = $region25
    $region24: #{global_dnn_9lifi_forward.1} parent=1 // pred_region
      %47 = dma.done [#allocation9], 2048
    $region25: #{global_dnn_9lifi_forward.1} parent=1 // pred_fallthru
      _
    %p50 = scmp.lt.u32.totalorder 64, 8
    %p51 = pneg %p50
    // Predicated region
    $region26: #{global_dnn_9lifi_forward.1} parent=1 // pred_check
      _
    $region27: #{global_dnn_9lifi_forward.1} parent=1 // pred_check_branch
      %53 = sbr.rel (%p50) target = $region29
    $region28: #{global_dnn_9lifi_forward.1} parent=1 // pred_region
      %s68 = sand.u32 64, 7
      %p69 = scmp.eq.s32.totalorder %s68, 0
      // Predicated region
      $region41: #{global_dnn_9lifi_forward.1} parent=28 // pred_check
        %p70 = pneg %p69
      $region42: #{global_dnn_9lifi_forward.1} parent=28 // pred_check_branch
        %72 = sbr.rel (%p70) target = $region44
      $region43: #{global_dnn_9lifi_forward.1} parent=28 // pred_region
        loop: start=0, step=1, limit=1
        $region45: #{global_dnn_9lifi_forward.1} parent=43 // loop_pre_header
          _
        $region46: #{global_dnn_9lifi_forward.1} parent=43 // loop_header
          %s74 = sphi 0, %s78
          %p75 = scmp.ge.s32.totalorder %s74, 1
          %s79 = sphi %s4, %s4
          %s80 = sphi [#allocation2], [#allocation2]
        $region47: #{global_dnn_9lifi_forward.1} parent=43 // loop_header_branch
          %77 = sbr.rel (%p75) target = $region51
        $region48: #{global_dnn_9lifi_forward.1} parent=43 // loop_body
          %v81 = vld [vmem:[%s79] sm:$0xff]
          %82 = vst [vmem:[%s80] sm:$0xff] %v81
          %v83 = vld [vmem:[%s79 + $0x8] sm:$0xff]
          %84 = vst [vmem:[%s80 + $0x8] sm:$0xff] %v83
          %v85 = vld [vmem:[%s79 + $0x10] sm:$0xff]
          %86 = vst [vmem:[%s80 + $0x10] sm:$0xff] %v85
          %v87 = vld [vmem:[%s79 + $0x18] sm:$0xff]
          %88 = vst [vmem:[%s80 + $0x18] sm:$0xff] %v87
          %v89 = vld [vmem:[%s79 + $0x20] sm:$0xff]
          %90 = vst [vmem:[%s80 + $0x20] sm:$0xff] %v89
          %v91 = vld [vmem:[%s79 + $0x28] sm:$0xff]
          %92 = vst [vmem:[%s80 + $0x28] sm:$0xff] %v91
          %v93 = vld [vmem:[%s79 + $0x30] sm:$0xff]
          %94 = vst [vmem:[%s80 + $0x30] sm:$0xff] %v93
          %v95 = vld [vmem:[%s79 + $0x38] sm:$0xff]
          %96 = vst [vmem:[%s80 + $0x38] sm:$0xff] %v95
        $region49: #{global_dnn_9lifi_forward.1} parent=43 // loop_footer
          %s78 = sadd.s32 1, %s74
        $region50: #{global_dnn_9lifi_forward.1} parent=43 // loop_footer_branch
          %73 = sbr.rel target = $region46
        $region51: #{global_dnn_9lifi_forward.1} parent=43 // loop_exit
          _
      $region44: #{global_dnn_9lifi_forward.1} parent=28 // pred_fallthru
        _
      %p97 = pneg %p69
      // Predicated region
      $region52: #{global_dnn_9lifi_forward.1} parent=28 // pred_check
        _
      $region53: #{global_dnn_9lifi_forward.1} parent=28 // pred_check_branch
        %99 = sbr.rel (%p69) target = $region55
      $region54: #{global_dnn_9lifi_forward.1} parent=28 // pred_region
        %s100 = sand.u32 64, 7
      $region55: #{global_dnn_9lifi_forward.1} parent=28 // pred_fallthru
        _
    $region29: #{global_dnn_9lifi_forward.1} parent=1 // pred_fallthru
      _
    // Predicated region
    $region30: #{global_dnn_9lifi_forward.1} parent=1 // pred_check
      %p54 = pneg %p50
    $region31: #{global_dnn_9lifi_forward.1} parent=1 // pred_check_branch
      %56 = sbr.rel (%p54) target = $region33
    $region32: #{global_dnn_9lifi_forward.1} parent=1 // pred_region
      %s57 = sshllo.u32 0, 64
      loop: start=0, step=1, limit=1
      $region34: #{global_dnn_9lifi_forward.1} parent=32 // loop_pre_header
        _
      $region35: #{global_dnn_9lifi_forward.1} parent=32 // loop_header
        %s59 = sphi 0, %s63
        %p60 = scmp.ge.s32.totalorder %s59, 1
        %s64 = sphi %s4, %s4
        %s65 = sphi [#allocation2], [#allocation2]
      $region36: #{global_dnn_9lifi_forward.1} parent=32 // loop_header_branch
        %62 = sbr.rel (%p60) target = $region40
      $region37: #{global_dnn_9lifi_forward.1} parent=32 // loop_body
        %v66 = vld [vmem:[%s64] sm:%s57]
        %67 = vst [vmem:[%s65] sm:%s57] %v66
      $region38: #{global_dnn_9lifi_forward.1} parent=32 // loop_footer
        %s63 = sadd.s32 1, %s59
      $region39: #{global_dnn_9lifi_forward.1} parent=32 // loop_footer_branch
        %58 = sbr.rel target = $region35
      $region40: #{global_dnn_9lifi_forward.1} parent=32 // loop_exit
        _
    $region33: #{global_dnn_9lifi_forward.1} parent=1 // pred_fallthru
      _
    // Predicated region
    $region56: #{global_dnn_9lifi_forward.1} parent=1 // pred_check
      _
    $region57: #{global_dnn_9lifi_forward.1} parent=1 // pred_check_branch
      %103 = sbr.rel (0) target = $region59
    $region58: #{global_dnn_9lifi_forward.1} parent=1 // pred_region
      %104 = vsyncadd [#allocation4], 1024
    $region59: #{global_dnn_9lifi_forward.1} parent=1 // pred_fallthru
      _
    %s105 = scalar_lea.sflag [#allocation4], 1
    %s107 = sshll.u32 1, 14
    %s108 = sxor.u32 4294967295, %s107
    %s110 = sld [smem:[#allocation0]]
    %s111 = sadd.s32 2, %s110
    %s113 = sshll.u32 7, 26
    %s114 = sxor.u32 4294967295, %s113
    %s115 = sand.u32 0, %s114
    %s116 = sshll.u32 %s111, 26
    %s117 = sor.u32 %s115, %s116
    %s118 = sshll.u32 [#allocation3], 4
    %s119 = int_to_ptr.vmem [resolvable:$true] %s118
    %122 = sst [smem:[#allocation13]] 512
    %s123 = scalar_lea.smem [#allocation13], 1
    %124 = sst [smem:[%s123]] 512
    %s125 = scalar_lea.smem [#allocation13], 2
    %126 = sst [smem:[%s125]] 4
    %s127 = scalar_lea.smem [#allocation13], 3
    %128 = sst [smem:[%s127]] 64
    %s129 = scalar_lea.smem [#allocation13], 4
    %130 = sst [smem:[%s129]] 128
    %s131 = scalar_lea.smem [#allocation13], 5
    %132 = sst [smem:[%s131]] 2
    %s133 = scalar_lea.smem [#allocation13], 6
    %134 = sst [smem:[%s133]] 256
    %s135 = scalar_lea.smem [#allocation13], 7
    %136 = sst [smem:[%s135]] 64
    %s137 = scalar_lea.smem [#allocation13], 8
    %138 = sst [smem:[%s137]] 4
    %140 = dma.general %s5, 4096, %s119, %s105, [#allocation12], [#allocation13], %s117, 0
    %v141 = vld [vmem:[%s3] sm:$0xff]
    %v142 = vld [vmem:[%s3 + $0x8] sm:$0xff]
    %v143 = vld [vmem:[%s3 + $0x10] sm:$0xff]
    %v144 = vld [vmem:[%s3 + $0x18] sm:$0xff]
    %v145 = vld [vmem:[%s0] sm:$0xff]
    %v146 = vld [vmem:[%s0 + $0x8] sm:$0xff]
    %v147 = vld [vmem:[%s0 + $0x10] sm:$0xff]
    %v148 = vld [vmem:[%s0 + $0x18] sm:$0xff]
    %v149 = vld [vmem:[%s0 + $0x20] sm:$0xff]
    %v150 = vpack.c.bf16 %v145, %v145
    %v151 = vpack.c.bf16 %v146, %v146
    %v152 = vpack.c.bf16 %v147, %v147
    %v153 = vpack.c.bf16 %v148, %v148
    %v154 = vpack.c.bf16 %v149, %v149
    %v155 = vld [vmem:[#allocation5] sm:$0xff]
    %v156 = vld [vmem:[#allocation5 + $0x8] sm:$0xff]
    %v157 = vld [vmem:[#allocation5 + $0x10] sm:$0xff]
    %v158 = vld [vmem:[#allocation5 + $0x18] sm:$0xff]
    %v159 = vld [vmem:[#allocation5 + $0x20] sm:$0xff]
    %v160 = vld [vmem:[#allocation5 + $0x28] sm:$0xff]
    %v161 = vld [vmem:[#allocation5 + $0x30] sm:$0xff]
    %v162 = vld [vmem:[#allocation5 + $0x38] sm:$0xff]
    %v163 = vld [vmem:[#allocation5 + $0x40] sm:$0xff]
    %v164 = vld [vmem:[#allocation5 + $0x48] sm:$0xff]
    %v165 = vld [vmem:[#allocation5 + $0x50] sm:$0xff]
    %v166 = vld [vmem:[#allocation5 + $0x58] sm:$0xff]
    %v167 = vld [vmem:[#allocation5 + $0x60] sm:$0xff]
    %v168 = vld [vmem:[#allocation5 + $0x68] sm:$0xff]
    %v169 = vld [vmem:[#allocation5 + $0x70] sm:$0xff]
    %v170 = vld [vmem:[#allocation5 + $0x78] sm:$0xff]
    %v171 = vld [vmem:[#allocation5 + $0x80] sm:$0xff]
    %v172 = vld [vmem:[#allocation5 + $0x88] sm:$0xff]
    %v173 = vld [vmem:[#allocation5 + $0x90] sm:$0xff]
    %v174 = vld [vmem:[#allocation5 + $0x98] sm:$0xff]
    %v175 = vld [vmem:[#allocation5 + $0xa0] sm:$0xff]
    %v176 = vld [vmem:[#allocation5 + $0xa8] sm:$0xff]
    %v177 = vld [vmem:[#allocation5 + $0xb0] sm:$0xff]
    %v178 = vld [vmem:[#allocation5 + $0xb8] sm:$0xff]
    %v179 = vld [vmem:[#allocation5 + $0xc0] sm:$0xff]
    %v180 = vld [vmem:[#allocation5 + $0xc8] sm:$0xff]
    %v181 = vld [vmem:[#allocation5 + $0xd0] sm:$0xff]
    %v182 = vld [vmem:[#allocation5 + $0xd8] sm:$0xff]
    %v183 = vld [vmem:[#allocation5 + $0xe0] sm:$0xff]
    %v184 = vld [vmem:[#allocation5 + $0xe8] sm:$0xff]
    %v185 = vld [vmem:[#allocation5 + $0xf0] sm:$0xff]
    %v186 = vld [vmem:[#allocation5 + $0xf8] sm:$0xff]
    %v187 = vld [vmem:[#allocation5 + $0x100] sm:$0xff]
    %v188 = vld [vmem:[#allocation5 + $0x108] sm:$0xff]
    %v189 = vld [vmem:[#allocation5 + $0x110] sm:$0xff]
    %v190 = vld [vmem:[#allocation5 + $0x118] sm:$0xff]
    %v191 = vld [vmem:[#allocation5 + $0x120] sm:$0xff]
    %v192 = vld [vmem:[#allocation5 + $0x128] sm:$0xff]
    %v193 = vld [vmem:[#allocation5 + $0x130] sm:$0xff]
    %v194 = vld [vmem:[#allocation5 + $0x138] sm:$0xff]
    %v195 = vld [vmem:[#allocation5 + $0x140] sm:$0xff]
    %v196 = vld [vmem:[#allocation5 + $0x148] sm:$0xff]
    %v197 = vld [vmem:[#allocation5 + $0x150] sm:$0xff]
    %v198 = vld [vmem:[#allocation5 + $0x158] sm:$0xff]
    %v199 = vld [vmem:[#allocation5 + $0x160] sm:$0xff]
    %v200 = vld [vmem:[#allocation5 + $0x168] sm:$0xff]
    %v201 = vld [vmem:[#allocation5 + $0x170] sm:$0xff]
    %v202 = vld [vmem:[#allocation5 + $0x178] sm:$0xff]
    %v203 = vld [vmem:[#allocation5 + $0x180] sm:$0xff]
    %v204 = vld [vmem:[#allocation5 + $0x188] sm:$0xff]
    %v205 = vld [vmem:[#allocation5 + $0x190] sm:$0xff]
    %v206 = vld [vmem:[#allocation5 + $0x198] sm:$0xff]
    %v207 = vld [vmem:[#allocation5 + $0x1a0] sm:$0xff]
    %v208 = vld [vmem:[#allocation5 + $0x1a8] sm:$0xff]
    %v209 = vld [vmem:[#allocation5 + $0x1b0] sm:$0xff]
    %v210 = vld [vmem:[#allocation5 + $0x1b8] sm:$0xff]
    %v211 = vld [vmem:[#allocation5 + $0x1c0] sm:$0xff]
    %v212 = vld [vmem:[#allocation5 + $0x1c8] sm:$0xff]
    %v213 = vld [vmem:[#allocation5 + $0x1d0] sm:$0xff]
    %v214 = vld [vmem:[#allocation5 + $0x1d8] sm:$0xff]
    %v215 = vld [vmem:[#allocation5 + $0x1e0] sm:$0xff]
    %v216 = vld [vmem:[#allocation5 + $0x1e8] sm:$0xff]
    %v217 = vld [vmem:[#allocation5 + $0x1f0] sm:$0xff]
    %v218 = vld [vmem:[#allocation5 + $0x1f8] sm:$0xff]
    %v219 = vld [vmem:[#allocation5 + $0x200] sm:$0xff]
    %v220 = vld [vmem:[#allocation5 + $0x208] sm:$0xff]
    %v221 = vld [vmem:[#allocation5 + $0x210] sm:$0xff]
    %v222 = vld [vmem:[#allocation5 + $0x218] sm:$0xff]
    %v223 = vld [vmem:[#allocation5 + $0x220] sm:$0xff]
    %v224 = vld [vmem:[#allocation5 + $0x228] sm:$0xff]
    %v225 = vld [vmem:[#allocation5 + $0x230] sm:$0xff]
    %v226 = vld [vmem:[#allocation5 + $0x238] sm:$0xff]
    %v227 = vld [vmem:[#allocation5 + $0x240] sm:$0xff]
    %v228 = vld [vmem:[#allocation5 + $0x248] sm:$0xff]
    %v229 = vld [vmem:[#allocation5 + $0x250] sm:$0xff]
    %v230 = vld [vmem:[#allocation5 + $0x258] sm:$0xff]
    %v231 = vld [vmem:[#allocation5 + $0x260] sm:$0xff]
    %v232 = vld [vmem:[#allocation5 + $0x268] sm:$0xff]
    %v233 = vld [vmem:[#allocation5 + $0x270] sm:$0xff]
    %v234 = vld [vmem:[#allocation5 + $0x278] sm:$0xff]
    %v315 = vunpack.c.l.b16 %v155
    %v316 = vunpack.c.h.b16 %v155
    %v317 = vunpack.c.l.b16 %v156
    %v318 = vunpack.c.h.b16 %v156
    %v319 = vunpack.c.l.b16 %v157
    %v320 = vunpack.c.h.b16 %v157
    %v321 = vunpack.c.l.b16 %v158
    %v322 = vunpack.c.h.b16 %v158
    %v323 = vunpack.c.l.b16 %v159
    %v324 = vunpack.c.h.b16 %v159
    %v325 = vunpack.c.l.b16 %v160
    %v326 = vunpack.c.h.b16 %v160
    %v327 = vunpack.c.l.b16 %v161
    %v328 = vunpack.c.h.b16 %v161
    %v329 = vunpack.c.l.b16 %v162
    %v330 = vunpack.c.h.b16 %v162
    %v331 = vunpack.c.l.b16 %v163
    %v332 = vunpack.c.h.b16 %v163
    %v333 = vunpack.c.l.b16 %v164
    %v334 = vunpack.c.h.b16 %v164
    %v335 = vunpack.c.l.b16 %v165
    %v336 = vunpack.c.h.b16 %v165
    %v337 = vunpack.c.l.b16 %v166
    %v338 = vunpack.c.h.b16 %v166
    %v339 = vunpack.c.l.b16 %v167
    %v340 = vunpack.c.h.b16 %v167
    %v341 = vunpack.c.l.b16 %v168
    %v342 = vunpack.c.h.b16 %v168
    %v343 = vunpack.c.l.b16 %v169
    %v344 = vunpack.c.h.b16 %v169
    %v345 = vunpack.c.l.b16 %v170
    %v346 = vunpack.c.h.b16 %v170
    %v347 = vunpack.c.l.b16 %v171
    %v348 = vunpack.c.h.b16 %v171
    %v349 = vunpack.c.l.b16 %v172
    %v350 = vunpack.c.h.b16 %v172
    %v351 = vunpack.c.l.b16 %v173
    %v352 = vunpack.c.h.b16 %v173
    %v353 = vunpack.c.l.b16 %v174
    %v354 = vunpack.c.h.b16 %v174
    %v355 = vunpack.c.l.b16 %v175
    %v356 = vunpack.c.h.b16 %v175
    %v357 = vunpack.c.l.b16 %v176
    %v358 = vunpack.c.h.b16 %v176
    %v359 = vunpack.c.l.b16 %v177
    %v360 = vunpack.c.h.b16 %v177
    %v361 = vunpack.c.l.b16 %v178
    %v362 = vunpack.c.h.b16 %v178
    %v363 = vunpack.c.l.b16 %v179
    %v364 = vunpack.c.h.b16 %v179
    %v365 = vunpack.c.l.b16 %v180
    %v366 = vunpack.c.h.b16 %v180
    %v367 = vunpack.c.l.b16 %v181
    %v368 = vunpack.c.h.b16 %v181
    %v369 = vunpack.c.l.b16 %v182
    %v370 = vunpack.c.h.b16 %v182
    %v371 = vunpack.c.l.b16 %v183
    %v372 = vunpack.c.h.b16 %v183
    %v373 = vunpack.c.l.b16 %v184
    %v374 = vunpack.c.h.b16 %v184
    %v375 = vunpack.c.l.b16 %v185
    %v376 = vunpack.c.h.b16 %v185
    %v377 = vunpack.c.l.b16 %v186
    %v378 = vunpack.c.h.b16 %v186
    %v379 = vunpack.c.l.b16 %v187
    %v380 = vunpack.c.h.b16 %v187
    %v381 = vunpack.c.l.b16 %v188
    %v382 = vunpack.c.h.b16 %v188
    %v383 = vunpack.c.l.b16 %v189
    %v384 = vunpack.c.h.b16 %v189
    %v385 = vunpack.c.l.b16 %v190
    %v386 = vunpack.c.h.b16 %v190
    %v387 = vunpack.c.l.b16 %v191
    %v388 = vunpack.c.h.b16 %v191
    %v389 = vunpack.c.l.b16 %v192
    %v390 = vunpack.c.h.b16 %v192
    %v391 = vunpack.c.l.b16 %v193
    %v392 = vunpack.c.h.b16 %v193
    %v393 = vunpack.c.l.b16 %v194
    %v394 = vunpack.c.h.b16 %v194
    %v395 = vunpack.c.l.b16 %v195
    %v396 = vunpack.c.h.b16 %v195
    %v397 = vunpack.c.l.b16 %v196
    %v398 = vunpack.c.h.b16 %v196
    %v399 = vunpack.c.l.b16 %v197
    %v400 = vunpack.c.h.b16 %v197
    %v401 = vunpack.c.l.b16 %v198
    %v402 = vunpack.c.h.b16 %v198
    %v403 = vunpack.c.l.b16 %v199
    %v404 = vunpack.c.h.b16 %v199
    %v405 = vunpack.c.l.b16 %v200
    %v406 = vunpack.c.h.b16 %v200
    %v407 = vunpack.c.l.b16 %v201
    %v408 = vunpack.c.h.b16 %v201
    %v409 = vunpack.c.l.b16 %v202
    %v410 = vunpack.c.h.b16 %v202
    %v411 = vunpack.c.l.b16 %v203
    %v412 = vunpack.c.h.b16 %v203
    %v413 = vunpack.c.l.b16 %v204
    %v414 = vunpack.c.h.b16 %v204
    %v415 = vunpack.c.l.b16 %v205
    %v416 = vunpack.c.h.b16 %v205
    %v417 = vunpack.c.l.b16 %v206
    %v418 = vunpack.c.h.b16 %v206
    %v419 = vunpack.c.l.b16 %v207
    %v420 = vunpack.c.h.b16 %v207
    %v421 = vunpack.c.l.b16 %v208
    %v422 = vunpack.c.h.b16 %v208
    %v423 = vunpack.c.l.b16 %v209
    %v424 = vunpack.c.h.b16 %v209
    %v425 = vunpack.c.l.b16 %v210
    %v426 = vunpack.c.h.b16 %v210
    %v427 = vunpack.c.l.b16 %v211
    %v428 = vunpack.c.h.b16 %v211
    %v429 = vunpack.c.l.b16 %v212
    %v430 = vunpack.c.h.b16 %v212
    %v431 = vunpack.c.l.b16 %v213
    %v432 = vunpack.c.h.b16 %v213
    %v433 = vunpack.c.l.b16 %v214
    %v434 = vunpack.c.h.b16 %v214
    %v435 = vunpack.c.l.b16 %v215
    %v436 = vunpack.c.h.b16 %v215
    %v437 = vunpack.c.l.b16 %v216
    %v438 = vunpack.c.h.b16 %v216
    %v439 = vunpack.c.l.b16 %v217
    %v440 = vunpack.c.h.b16 %v217
    %v441 = vunpack.c.l.b16 %v218
    %v442 = vunpack.c.h.b16 %v218
    %v443 = vunpack.c.l.b16 %v219
    %v444 = vunpack.c.h.b16 %v219
    %v445 = vunpack.c.l.b16 %v220
    %v446 = vunpack.c.h.b16 %v220
    %v447 = vunpack.c.l.b16 %v221
    %v448 = vunpack.c.h.b16 %v221
    %v449 = vunpack.c.l.b16 %v222
    %v450 = vunpack.c.h.b16 %v222
    %v451 = vunpack.c.l.b16 %v223
    %v452 = vunpack.c.h.b16 %v223
    %v453 = vunpack.c.l.b16 %v224
    %v454 = vunpack.c.h.b16 %v224
    %v455 = vunpack.c.l.b16 %v225
    %v456 = vunpack.c.h.b16 %v225
    %v457 = vunpack.c.l.b16 %v226
    %v458 = vunpack.c.h.b16 %v226
    %v459 = vunpack.c.l.b16 %v227
    %v460 = vunpack.c.h.b16 %v227
    %v461 = vunpack.c.l.b16 %v228
    %v462 = vunpack.c.h.b16 %v228
    %v463 = vunpack.c.l.b16 %v229
    %v464 = vunpack.c.h.b16 %v229
    %v465 = vunpack.c.l.b16 %v230
    %v466 = vunpack.c.h.b16 %v230
    %v467 = vunpack.c.l.b16 %v231
    %v468 = vunpack.c.h.b16 %v231
    %v469 = vunpack.c.l.b16 %v232
    %v470 = vunpack.c.h.b16 %v232
    %v471 = vunpack.c.l.b16 %v233
    %v472 = vunpack.c.h.b16 %v233
    %v473 = vunpack.c.l.b16 %v234
    %v474 = vunpack.c.h.b16 %v234
    %v475 = vpack.c.b16 %v317, %v315
    %v476 = vpack.c.b16 %v318, %v316
    %v477 = vpack.c.b16 %v321, %v319
    %v478 = vpack.c.b16 %v322, %v320
    %v479 = vpack.c.b16 %v325, %v323
    %v480 = vpack.c.b16 %v326, %v324
    %v481 = vpack.c.b16 %v329, %v327
    %v482 = vpack.c.b16 %v330, %v328
    %v483 = vpack.c.b16 %v333, %v331
    %v484 = vpack.c.b16 %v334, %v332
    %v485 = vpack.c.b16 %v337, %v335
    %v486 = vpack.c.b16 %v338, %v336
    %v487 = vpack.c.b16 %v341, %v339
    %v488 = vpack.c.b16 %v342, %v340
    %v489 = vpack.c.b16 %v345, %v343
    %v490 = vpack.c.b16 %v346, %v344
    %v491 = vpack.c.b16 %v349, %v347
    %v492 = vpack.c.b16 %v350, %v348
    %v493 = vpack.c.b16 %v353, %v351
    %v494 = vpack.c.b16 %v354, %v352
    %v495 = vpack.c.b16 %v357, %v355
    %v496 = vpack.c.b16 %v358, %v356
    %v497 = vpack.c.b16 %v361, %v359
    %v498 = vpack.c.b16 %v362, %v360
    %v499 = vpack.c.b16 %v365, %v363
    %v500 = vpack.c.b16 %v366, %v364
    %v501 = vpack.c.b16 %v369, %v367
    %v502 = vpack.c.b16 %v370, %v368
    %v503 = vpack.c.b16 %v373, %v371
    %v504 = vpack.c.b16 %v374, %v372
    %v505 = vpack.c.b16 %v377, %v375
    %v506 = vpack.c.b16 %v378, %v376
    %v507 = vpack.c.b16 %v381, %v379
    %v508 = vpack.c.b16 %v382, %v380
    %v509 = vpack.c.b16 %v385, %v383
    %v510 = vpack.c.b16 %v386, %v384
    %v511 = vpack.c.b16 %v389, %v387
    %v512 = vpack.c.b16 %v390, %v388
    %v513 = vpack.c.b16 %v393, %v391
    %v514 = vpack.c.b16 %v394, %v392
    %v515 = vpack.c.b16 %v397, %v395
    %v516 = vpack.c.b16 %v398, %v396
    %v517 = vpack.c.b16 %v401, %v399
    %v518 = vpack.c.b16 %v402, %v400
    %v519 = vpack.c.b16 %v405, %v403
    %v520 = vpack.c.b16 %v406, %v404
    %v521 = vpack.c.b16 %v409, %v407
    %v522 = vpack.c.b16 %v410, %v408
    %v523 = vpack.c.b16 %v413, %v411
    %v524 = vpack.c.b16 %v414, %v412
    %v525 = vpack.c.b16 %v417, %v415
    %v526 = vpack.c.b16 %v418, %v416
    %v527 = vpack.c.b16 %v421, %v419
    %v528 = vpack.c.b16 %v422, %v420
    %v529 = vpack.c.b16 %v425, %v423
    %v530 = vpack.c.b16 %v426, %v424
    %v531 = vpack.c.b16 %v429, %v427
    %v532 = vpack.c.b16 %v430, %v428
    %v533 = vpack.c.b16 %v433, %v431
    %v534 = vpack.c.b16 %v434, %v432
    %v535 = vpack.c.b16 %v437, %v435
    %v536 = vpack.c.b16 %v438, %v436
    %v537 = vpack.c.b16 %v441, %v439
    %v538 = vpack.c.b16 %v442, %v440
    %v539 = vpack.c.b16 %v445, %v443
    %v540 = vpack.c.b16 %v446, %v444
    %v541 = vpack.c.b16 %v449, %v447
    %v542 = vpack.c.b16 %v450, %v448
    %v543 = vpack.c.b16 %v453, %v451
    %v544 = vpack.c.b16 %v454, %v452
    %v545 = vpack.c.b16 %v457, %v455
    %v546 = vpack.c.b16 %v458, %v456
    %v547 = vpack.c.b16 %v461, %v459
    %v548 = vpack.c.b16 %v462, %v460
    %v549 = vpack.c.b16 %v465, %v463
    %v550 = vpack.c.b16 %v466, %v464
    %v551 = vpack.c.b16 %v469, %v467
    %v552 = vpack.c.b16 %v470, %v468
    %v553 = vpack.c.b16 %v473, %v471
    %v554 = vpack.c.b16 %v474, %v472
    %635 = vmatprep.subr.bf16.mxu0 %v476
    %636 = vmatpush1.bf16.msra.mxu0 %v475
    %637 = vmatprep.subr.bf16.mxu0 %v478
    %638 = vmatpush1.bf16.msra.mxu0 %v477
    %639 = vmatprep.subr.bf16.mxu0 %v480
    %640 = vmatpush1.bf16.msra.mxu0 %v479
    %641 = vmatprep.subr.bf16.mxu0 %v482
    %642 = vmatpush1.bf16.msra.mxu0 %v481
    %643 = vmatprep.subr.bf16.mxu0 %v484
    %644 = vmatpush1.bf16.msra.mxu0 %v483
    %645 = vmatprep.subr.bf16.mxu0 %v486
    %646 = vmatpush1.bf16.msra.mxu0 %v485
    %647 = vmatprep.subr.bf16.mxu0 %v488
    %648 = vmatpush1.bf16.msra.mxu0 %v487
    %649 = vmatprep.subr.bf16.mxu0 %v490
    %650 = vmatpush1.bf16.msra.mxu0 %v489
    %651 = vmatprep.subr.bf16.mxu0 %v492
    %652 = vmatpush1.bf16.msra.mxu0 %v491
    %653 = vmatprep.subr.bf16.mxu0 %v494
    %654 = vmatpush1.bf16.msra.mxu0 %v493
    %655 = vmatprep.subr.bf16.mxu0 %v496
    %656 = vmatpush1.bf16.msra.mxu0 %v495
    %657 = vmatprep.subr.bf16.mxu0 %v498
    %658 = vmatpush1.bf16.msra.mxu0 %v497
    %659 = vmatprep.subr.bf16.mxu0 %v500
    %660 = vmatpush1.bf16.msra.mxu0 %v499
    %661 = vmatprep.subr.bf16.mxu0 %v502
    %662 = vmatpush1.bf16.msra.mxu0 %v501
    %663 = vmatprep.subr.bf16.mxu0 %v504
    %664 = vmatpush1.bf16.msra.mxu0 %v503
    %665 = vmatprep.subr.bf16.mxu0 %v506
    %666 = vmatpush1.bf16.msra.mxu0 %v505
    %667 = vmatprep.mubr.bf16.mxu0 %v151
    %668 = vmatmul.mubr.bf16.gmra.mrb[0].mxu0 %v150
    %v669 = vpop.f32.mrb[0].mxu0
    %v670 = vadd.f32 0.0, %v669
    %v671 = vpop.f32.mrb[0].mxu0
    %v672 = vadd.f32 0.0, %v671
    %v673 = vpop.f32.mrb[0].mxu0
    %v674 = vpop.f32.mrb[0].mxu0
    %675 = vdwg.mxu0
    %676 = vmatprep.subr.bf16.mxu0 %v508
    %677 = vmatpush1.bf16.msra.mxu0 %v507
    %678 = vmatprep.subr.bf16.mxu0 %v510
    %679 = vmatpush1.bf16.msra.mxu0 %v509
    %680 = vmatprep.subr.bf16.mxu0 %v512
    %681 = vmatpush1.bf16.msra.mxu0 %v511
    %682 = vmatprep.subr.bf16.mxu0 %v514
    %683 = vmatpush1.bf16.msra.mxu0 %v513
    %684 = vmatprep.subr.bf16.mxu0 %v516
    %685 = vmatpush1.bf16.msra.mxu0 %v515
    %686 = vmatprep.subr.bf16.mxu0 %v518
    %687 = vmatpush1.bf16.msra.mxu0 %v517
    %688 = vmatprep.subr.bf16.mxu0 %v520
    %689 = vmatpush1.bf16.msra.mxu0 %v519
    %690 = vmatprep.subr.bf16.mxu0 %v522
    %691 = vmatpush1.bf16.msra.mxu0 %v521
    %692 = vmatprep.subr.bf16.mxu0 %v524
    %693 = vmatpush1.bf16.msra.mxu0 %v523
    %694 = vmatprep.subr.bf16.mxu0 %v526
    %695 = vmatpush1.bf16.msra.mxu0 %v525
    %696 = vmatprep.subr.bf16.mxu0 %v528
    %697 = vmatpush1.bf16.msra.mxu0 %v527
    %698 = vmatprep.subr.bf16.mxu0 %v530
    %699 = vmatpush1.bf16.msra.mxu0 %v529
    %700 = vmatprep.subr.bf16.mxu0 %v532
    %701 = vmatpush1.bf16.msra.mxu0 %v531
    %702 = vmatprep.subr.bf16.mxu0 %v534
    %703 = vmatpush1.bf16.msra.mxu0 %v533
    %704 = vmatprep.subr.bf16.mxu0 %v536
    %705 = vmatpush1.bf16.msra.mxu0 %v535
    %706 = vmatprep.subr.bf16.mxu0 %v538
    %707 = vmatpush1.bf16.msra.mxu0 %v537
    %708 = vmatprep.mubr.bf16.mxu0 %v153
    %709 = vmatmul.mubr.bf16.gmra.mrb[0].mxu0 %v152
    %v710 = vpop.f32.mrb[0].mxu0
    %v711 = vadd.f32 %v670, %v710
    %v712 = vpop.f32.mrb[0].mxu0
    %v713 = vadd.f32 %v672, %v712
    %v714 = vpop.f32.mrb[0].mxu0
    %v715 = vpop.f32.mrb[0].mxu0
    %716 = vdwg.mxu0
    %717 = vmatprep.subr.bf16.mxu0 %v540
    %718 = vmatpush1.bf16.msra.mxu0 %v539
    %719 = vmatprep.subr.bf16.mxu0 %v542
    %720 = vmatpush1.bf16.msra.mxu0 %v541
    %721 = vmatprep.subr.bf16.mxu0 %v544
    %722 = vmatpush1.bf16.msra.mxu0 %v543
    %723 = vmatprep.subr.bf16.mxu0 %v546
    %724 = vmatpush1.bf16.msra.mxu0 %v545
    %725 = vmatprep.subr.bf16.mxu0 %v548
    %726 = vmatpush1.bf16.msra.mxu0 %v547
    %727 = vmatprep.subr.bf16.mxu0 %v550
    %728 = vmatpush1.bf16.msra.mxu0 %v549
    %729 = vmatprep.subr.bf16.mxu0 %v552
    %730 = vmatpush1.bf16.msra.mxu0 %v551
    %731 = vmatprep.subr.bf16.mxu0 %v554
    %732 = vmatpush1.bf16.msra.mxu0 %v553
    %733 = vmatprep.subr.bf16.mxu0 0
    %734 = vmatpush1.bf16.msra.mxu0 0
    %735 = vmatprep.subr.bf16.mxu0 0
    %736 = vmatpush1.bf16.msra.mxu0 0
    %737 = vmatprep.subr.bf16.mxu0 0
    %738 = vmatpush1.bf16.msra.mxu0 0
    %739 = vmatprep.subr.bf16.mxu0 0
    %740 = vmatpush1.bf16.msra.mxu0 0
    %741 = vmatprep.subr.bf16.mxu0 0
    %742 = vmatpush1.bf16.msra.mxu0 0
    %743 = vmatprep.subr.bf16.mxu0 0
    %744 = vmatpush1.bf16.msra.mxu0 0
    %745 = vmatprep.subr.bf16.mxu0 0
    %746 = vmatpush1.bf16.msra.mxu0 0
    %747 = vmatprep.subr.bf16.mxu0 0
    %748 = vmatpush1.bf16.msra.mxu0 0
    %749 = vmatprep.mubr.bf16.mxu0 0
    %750 = vmatmul.mubr.bf16.gmra.mrb[0].mxu0 %v154
    %v751 = vpop.f32.mrb[0].mxu0
    %v752 = vadd.f32 %v711, %v751
    %v753 = vpop.f32.mrb[0].mxu0
    %v754 = vadd.f32 %v713, %v753
    %v755 = vpop.f32.mrb[0].mxu0
    %v756 = vpop.f32.mrb[0].mxu0
    %757 = vdwg.mxu0
    %v758 = vrot.slane %v752, 4
    %v759 = vadd.f32 %v752, %v758
    %v760 = vrot.slane %v759, 2
    %v761 = vadd.f32 %v759, %v760
    %v762 = vrot.slane %v761, 1
    %v763 = vadd.f32 %v761, %v762
    %v764 = vrot.slane %v754, 4
    %v765 = vadd.f32 %v754, %v764
    %v766 = vrot.slane %v765, 2
    %v767 = vadd.f32 %v765, %v766
    %v768 = vrot.slane %v767, 1
    %v769 = vadd.f32 %v767, %v768
    %v770 = vrcp.pop 8.0
    %v771 = vmul.f32 %v763, %v770
    %v772 = vmul.f32 %v769, %v770
    %v773 = vmul.f32 %v752, %v752
    %v774 = vmul.f32 %v754, %v754
    %v775 = vrot.slane %v773, 4
    %v776 = vadd.f32 %v773, %v775
    %v777 = vrot.slane %v776, 2
    %v778 = vadd.f32 %v776, %v777
    %v779 = vrot.slane %v778, 1
    %v780 = vadd.f32 %v778, %v779
    %v781 = vrot.slane %v774, 4
    %v782 = vadd.f32 %v774, %v781
    %v783 = vrot.slane %v782, 2
    %v784 = vadd.f32 %v782, %v783
    %v785 = vrot.slane %v784, 1
    %v786 = vadd.f32 %v784, %v785
    %v787 = vmul.f32 %v780, %v770
    %v788 = vmul.f32 %v786, %v770
    %v789 = vmul.f32 %v771, %v771
    %v790 = vmul.f32 %v772, %v772
    %v791 = vsub.f32 %v787, %v789
    %v792 = vsub.f32 %v788, %v790
    %v793 = vmax.f32 %v791, 0.0
    %v794 = vmax.f32 %v792, 0.0
    %v795 = vadd.f32 %v793, 1e-05
    %v796 = vadd.f32 %v794, 1e-05
    %v797 = vrsqrt.pop %v795
    %v798 = vrsqrt.pop %v796
    %v799 = vmul.f32 %v141, %v797
    %v800 = vmul.f32 %v142, %v798
    %v801 = vsub.f32 %v752, %v771
    %v802 = vsub.f32 %v754, %v772
    %v803 = vlaneseq
    %v804 = vshrl.u32 %v803, 7
    %v805 = vsub.s32 0, %v804
    %v806 = vrot.slane %v799, %v805
    %v807 = vlaneseq
    %v808 = vshrl.u32 %v807, 7
    %v809 = vsub.s32 0, %v808
    %v810 = vrot.slane %v800, %v809
    %v811 = vmul.f32 %v801, %v806
    %v812 = vmul.f32 %v802, %v810
    %v813 = vlaneseq
    %v814 = vshrl.u32 %v813, 7
    %v815 = vsub.s32 1, %v814
    %v816 = vrot.slane %v141, %v815
    %v817 = vlaneseq
    %v818 = vshrl.u32 %v817, 7
    %v819 = vsub.s32 1, %v818
    %v820 = vrot.slane %v142, %v819
    %v821 = vadd.f32 %v811, %v816
    %v822 = vadd.f32 %v812, %v820
    %v823 = vmax.f32 %v821, 0.0
    %v824 = vmax.f32 %v822, 0.0
    %v825 = vpack.c.bf16 %v823, %v823
    %v826 = vpack.c.bf16 %v824, %v824
    %v827 = vld [vmem:[#allocation8] sm:$0xf]
    %v828 = vld [vmem:[#allocation8 + $0x4] sm:$0xf]
    %v829 = vld [vmem:[#allocation8 + $0x8] sm:$0xf]
    %v830 = vld [vmem:[#allocation8 + $0xc] sm:$0xf]
    %v831 = vld [vmem:[#allocation8 + $0x10] sm:$0xf]
    %v832 = vld [vmem:[#allocation8 + $0x14] sm:$0xf]
    %v833 = vld [vmem:[#allocation8 + $0x18] sm:$0xf]
    %v834 = vld [vmem:[#allocation8 + $0x1c] sm:$0xf]
    %v835 = vld [vmem:[#allocation8 + $0x20] sm:$0xf]
    %v836 = vld [vmem:[#allocation8 + $0x24] sm:$0xf]
    %v837 = vld [vmem:[#allocation8 + $0x28] sm:$0xf]
    %v838 = vld [vmem:[#allocation8 + $0x2c] sm:$0xf]
    %v839 = vld [vmem:[#allocation8 + $0x30] sm:$0xf]
    %v840 = vld [vmem:[#allocation8 + $0x34] sm:$0xf]
    %v841 = vld [vmem:[#allocation8 + $0x38] sm:$0xf]
    %v842 = vld [vmem:[#allocation8 + $0x3c] sm:$0xf]
    %v843 = vld [vmem:[#allocation8 + $0x40] sm:$0xf]
    %v844 = vld [vmem:[#allocation8 + $0x44] sm:$0xf]
    %v845 = vld [vmem:[#allocation8 + $0x48] sm:$0xf]
    %v846 = vld [vmem:[#allocation8 + $0x4c] sm:$0xf]
    %v847 = vld [vmem:[#allocation8 + $0x50] sm:$0xf]
    %v848 = vld [vmem:[#allocation8 + $0x54] sm:$0xf]
    %v849 = vld [vmem:[#allocation8 + $0x58] sm:$0xf]
    %v850 = vld [vmem:[#allocation8 + $0x5c] sm:$0xf]
    %v851 = vld [vmem:[#allocation8 + $0x60] sm:$0xf]
    %v852 = vld [vmem:[#allocation8 + $0x64] sm:$0xf]
    %v853 = vld [vmem:[#allocation8 + $0x68] sm:$0xf]
    %v854 = vld [vmem:[#allocation8 + $0x6c] sm:$0xf]
    %v855 = vld [vmem:[#allocation8 + $0x70] sm:$0xf]
    %v856 = vld [vmem:[#allocation8 + $0x74] sm:$0xf]
    %v857 = vld [vmem:[#allocation8 + $0x78] sm:$0xf]
    %v858 = vld [vmem:[#allocation8 + $0x7c] sm:$0xf]
    %v891 = vunpack.c.l.b16 %v827
    %v892 = vunpack.c.l.b16 %v828
    %v893 = vunpack.c.l.b16 %v829
    %v894 = vunpack.c.l.b16 %v830
    %v895 = vunpack.c.l.b16 %v831
    %v896 = vunpack.c.l.b16 %v832
    %v897 = vunpack.c.l.b16 %v833
    %v898 = vunpack.c.l.b16 %v834
    %v899 = vunpack.c.l.b16 %v835
    %v900 = vunpack.c.l.b16 %v836
    %v901 = vunpack.c.l.b16 %v837
    %v902 = vunpack.c.l.b16 %v838
    %v903 = vunpack.c.l.b16 %v839
    %v904 = vunpack.c.l.b16 %v840
    %v905 = vunpack.c.l.b16 %v841
    %v906 = vunpack.c.l.b16 %v842
    %v907 = vunpack.c.l.b16 %v843
    %v908 = vunpack.c.l.b16 %v844
    %v909 = vunpack.c.l.b16 %v845
    %v910 = vunpack.c.l.b16 %v846
    %v911 = vunpack.c.l.b16 %v847
    %v912 = vunpack.c.l.b16 %v848
    %v913 = vunpack.c.l.b16 %v849
    %v914 = vunpack.c.l.b16 %v850
    %v915 = vunpack.c.l.b16 %v851
    %v916 = vunpack.c.l.b16 %v852
    %v917 = vunpack.c.l.b16 %v853
    %v918 = vunpack.c.l.b16 %v854
    %v919 = vunpack.c.l.b16 %v855
    %v920 = vunpack.c.l.b16 %v856
    %v921 = vunpack.c.l.b16 %v857
    %v922 = vunpack.c.l.b16 %v858
    %v923 = vpack.c.b16 %v892, %v891
    %v924 = vpack.c.b16 %v894, %v893
    %v925 = vpack.c.b16 %v896, %v895
    %v926 = vpack.c.b16 %v898, %v897
    %v927 = vpack.c.b16 %v900, %v899
    %v928 = vpack.c.b16 %v902, %v901
    %v929 = vpack.c.b16 %v904, %v903
    %v930 = vpack.c.b16 %v906, %v905
    %v931 = vpack.c.b16 %v908, %v907
    %v932 = vpack.c.b16 %v910, %v909
    %v933 = vpack.c.b16 %v912, %v911
    %v934 = vpack.c.b16 %v914, %v913
    %v935 = vpack.c.b16 %v916, %v915
    %v936 = vpack.c.b16 %v918, %v917
    %v937 = vpack.c.b16 %v920, %v919
    %v938 = vpack.c.b16 %v922, %v921
    %955 = vmatprep.subr.bf16.mxu0 0
    %956 = vmatpush1.bf16.msra.mxu0 %v923
    %957 = vmatprep.subr.bf16.mxu0 0
    %958 = vmatpush1.bf16.msra.mxu0 %v924
    %959 = vmatprep.subr.bf16.mxu0 0
    %960 = vmatpush1.bf16.msra.mxu0 %v925
    %961 = vmatprep.subr.bf16.mxu0 0
    %962 = vmatpush1.bf16.msra.mxu0 %v926
    %963 = vmatprep.subr.bf16.mxu0 0
    %964 = vmatpush1.bf16.msra.mxu0 %v927
    %965 = vmatprep.subr.bf16.mxu0 0
    %966 = vmatpush1.bf16.msra.mxu0 %v928
    %967 = vmatprep.subr.bf16.mxu0 0
    %968 = vmatpush1.bf16.msra.mxu0 %v929
    %969 = vmatprep.subr.bf16.mxu0 0
    %970 = vmatpush1.bf16.msra.mxu0 %v930
    %971 = vmatprep.subr.bf16.mxu0 0
    %972 = vmatpush1.bf16.msra.mxu0 %v931
    %973 = vmatprep.subr.bf16.mxu0 0
    %974 = vmatpush1.bf16.msra.mxu0 %v932
    %975 = vmatprep.subr.bf16.mxu0 0
    %976 = vmatpush1.bf16.msra.mxu0 %v933
    %977 = vmatprep.subr.bf16.mxu0 0
    %978 = vmatpush1.bf16.msra.mxu0 %v934
    %979 = vmatprep.subr.bf16.mxu0 0
    %980 = vmatpush1.bf16.msra.mxu0 %v935
    %981 = vmatprep.subr.bf16.mxu0 0
    %982 = vmatpush1.bf16.msra.mxu0 %v936
    %983 = vmatprep.subr.bf16.mxu0 0
    %984 = vmatpush1.bf16.msra.mxu0 %v937
    %985 = vmatprep.subr.bf16.mxu0 0
    %986 = vmatpush1.bf16.msra.mxu0 %v938
    %987 = vmatprep.mubr.bf16.mxu0 %v826
    %988 = vmatmul.mubr.bf16.gmra.mrb[0].mxu0 %v825
    %v989 = vpop.f32.mrb[0].mxu0
    %v990 = vadd.f32 0.0, %v989
    %v991 = vpop.f32.mrb[0].mxu0
    %v992 = vpop.f32.mrb[0].mxu0
    %v993 = vpop.f32.mrb[0].mxu0
    %994 = vdwg.mxu0
    %v995 = vrot.slane %v990, 4
    %v996 = vadd.f32 %v990, %v995
    %v997 = vrot.slane %v996, 2
    %v998 = vadd.f32 %v996, %v997
    %v999 = vrot.slane %v998, 1
    %v1000 = vadd.f32 %v998, %v999
    %v1001 = vmul.f32 %v1000, %v770
    %v1002 = vmul.f32 %v990, %v990
    %v1003 = vrot.slane %v1002, 4
    %v1004 = vadd.f32 %v1002, %v1003
    %v1005 = vrot.slane %v1004, 2
    %v1006 = vadd.f32 %v1004, %v1005
    %v1007 = vrot.slane %v1006, 1
    %v1008 = vadd.f32 %v1006, %v1007
    %v1009 = vmul.f32 %v1008, %v770
    %v1010 = vmul.f32 %v1001, %v1001
    %v1011 = vsub.f32 %v1009, %v1010
    %v1012 = vmax.f32 %v1011, 0.0
    %v1013 = vadd.f32 %v1012, 1e-05
    %v1014 = vrsqrt.pop %v1013
    %v1015 = vmul.f32 %v141, %v1014
    %v1016 = vsub.f32 %v990, %v1001
    %v1017 = vlaneseq
    %v1018 = vshrl.u32 %v1017, 7
    %v1019 = vsub.s32 2, %v1018
    %v1020 = vrot.slane %v1015, %v1019
    %v1021 = vmul.f32 %v1016, %v1020
    %v1022 = vlaneseq
    %v1023 = vshrl.u32 %v1022, 7
    %v1024 = vsub.s32 3, %v1023
    %v1025 = vrot.slane %v141, %v1024
    %v1026 = vadd.f32 %v1021, %v1025
    %v1027 = vmax.f32 %v1026, 0.0
    %s1028 = smul.u32 4, 16
    %s1029 = smul.u32 %s1028, 1
    %s1030 = sshll.u32 %s1029, 4
    %1031 = dma.done [#allocation4], %s1030
    %v1032 = vpack.c.bf16 %v1027, %v1027
    %v1033 = vld [vmem:[#allocation2] sm:$0xff]
    %v1034 = vld [vmem:[#allocation2 + $0x8] sm:$0xff]
    %v1035 = vld [vmem:[#allocation2 + $0x10] sm:$0xff]
    %v1036 = vld [vmem:[#allocation2 + $0x18] sm:$0xff]
    %v1037 = vld [vmem:[#allocation2 + $0x20] sm:$0xff]
    %v1038 = vld [vmem:[#allocation2 + $0x28] sm:$0xff]
    %v1039 = vld [vmem:[#allocation2 + $0x30] sm:$0xff]
    %v1040 = vld [vmem:[#allocation2 + $0x38] sm:$0xff]
    %1041 = vmatprep.subr.bf16.mxu0 0
    %1042 = vmatpush1.bf16.msra.mxu0 %v1033
    %1043 = vmatprep.subr.bf16.mxu0 0
    %1044 = vmatpush1.bf16.msra.mxu0 %v1034
    %1045 = vmatprep.subr.bf16.mxu0 0
    %1046 = vmatpush1.bf16.msra.mxu0 %v1035
    %1047 = vmatprep.subr.bf16.mxu0 0
    %1048 = vmatpush1.bf16.msra.mxu0 %v1036
    %1049 = vmatprep.subr.bf16.mxu0 0
    %1050 = vmatpush1.bf16.msra.mxu0 %v1037
    %1051 = vmatprep.subr.bf16.mxu0 0
    %1052 = vmatpush1.bf16.msra.mxu0 %v1038
    %1053 = vmatprep.subr.bf16.mxu0 0
    %1054 = vmatpush1.bf16.msra.mxu0 %v1039
    %1055 = vmatprep.subr.bf16.mxu0 0
    %1056 = vmatpush1.bf16.msra.mxu0 %v1040
    %1057 = vmatprep.subr.bf16.mxu0 0
    %1058 = vmatpush1.bf16.msra.mxu0 0
    %1059 = vmatprep.subr.bf16.mxu0 0
    %1060 = vmatpush1.bf16.msra.mxu0 0
    %1061 = vmatprep.subr.bf16.mxu0 0
    %1062 = vmatpush1.bf16.msra.mxu0 0
    %1063 = vmatprep.subr.bf16.mxu0 0
    %1064 = vmatpush1.bf16.msra.mxu0 0
    %1065 = vmatprep.subr.bf16.mxu0 0
    %1066 = vmatpush1.bf16.msra.mxu0 0
    %1067 = vmatprep.subr.bf16.mxu0 0
    %1068 = vmatpush1.bf16.msra.mxu0 0
    %1069 = vmatprep.subr.bf16.mxu0 0
    %1070 = vmatpush1.bf16.msra.mxu0 0
    %1071 = vmatprep.subr.bf16.mxu0 0
    %1072 = vmatpush1.bf16.msra.mxu0 0
    %1073 = vmatprep.mubr.bf16.mxu0 0
    %1074 = vmatmul.mubr.bf16.gmra.mrb[0].mxu0 %v1032
    %v1075 = vpop.f32.mrb[0].mxu0
    %v1076 = vadd.f32 0.0, %v1075
    %v1077 = vpop.f32.mrb[0].mxu0
    %v1078 = vpop.f32.mrb[0].mxu0
    %v1079 = vpop.f32.mrb[0].mxu0
    %1080 = vdwg.mxu0
    %v1081 = vrot.slane %v1076, 4
    %v1082 = vadd.f32 %v1076, %v1081
    %v1083 = vrot.slane %v1082, 2
    %v1084 = vadd.f32 %v1082, %v1083
    %v1085 = vrot.slane %v1084, 1
    %v1086 = vadd.f32 %v1084, %v1085
    %v1087 = vmul.f32 %v1086, %v770
    %v1088 = vmul.f32 %v1076, %v1076
    %v1089 = vrot.slane %v1088, 4
    %v1090 = vadd.f32 %v1088, %v1089
    %v1091 = vrot.slane %v1090, 2
    %v1092 = vadd.f32 %v1090, %v1091
    %v1093 = vrot.slane %v1092, 1
    %v1094 = vadd.f32 %v1092, %v1093
    %v1095 = vmul.f32 %v1094, %v770
    %v1096 = vmul.f32 %v1087, %v1087
    %v1097 = vsub.f32 %v1095, %v1096
    %v1098 = vmax.f32 %v1097, 0.0
    %v1099 = vadd.f32 %v1098, 1e-05
    %v1100 = vrsqrt.pop %v1099
    %v1101 = vmul.f32 %v141, %v1100
    %v1102 = vsub.f32 %v1076, %v1087
    %v1103 = vlaneseq
    %v1104 = vshrl.u32 %v1103, 7
    %v1105 = vsub.s32 4, %v1104
    %v1106 = vrot.slane %v1101, %v1105
    %v1107 = vmul.f32 %v1102, %v1106
    %v1108 = vlaneseq
    %v1109 = vshrl.u32 %v1108, 7
    %v1110 = vsub.s32 5, %v1109
    %v1111 = vrot.slane %v141, %v1110
    %v1112 = vadd.f32 %v1107, %v1111
    %v1113 = vmax.f32 %v1112, 0.0
    %s1114 = smul.u32 %s1028, 4
    %s1115 = sshll.u32 %s1114, 4
    %1116 = dma.done %s105, %s1115
    %v1117 = vpack.c.bf16 %v1113, %v1113
    %v1118 = vld [vmem:[#allocation3] sm:$0xff]
    %v1119 = vld [vmem:[#allocation3 + $0x8] sm:$0xff]
    %v1120 = vld [vmem:[#allocation3 + $0x10] sm:$0xff]
    %v1121 = vld [vmem:[#allocation3 + $0x18] sm:$0xff]
    %v1122 = vld [vmem:[#allocation3 + $0x20] sm:$0xff]
    %v1123 = vld [vmem:[#allocation3 + $0x28] sm:$0xff]
    %v1124 = vld [vmem:[#allocation3 + $0x30] sm:$0xff]
    %v1125 = vld [vmem:[#allocation3 + $0x38] sm:$0xff]
    %v1126 = vld [vmem:[#allocation3 + $0x40] sm:$0xff]
    %v1127 = vld [vmem:[#allocation3 + $0x48] sm:$0xff]
    %v1128 = vld [vmem:[#allocation3 + $0x50] sm:$0xff]
    %v1129 = vld [vmem:[#allocation3 + $0x58] sm:$0xff]
    %v1130 = vld [vmem:[#allocation3 + $0x60] sm:$0xff]
    %v1131 = vld [vmem:[#allocation3 + $0x68] sm:$0xff]
    %v1132 = vld [vmem:[#allocation3 + $0x70] sm:$0xff]
    %v1133 = vld [vmem:[#allocation3 + $0x78] sm:$0xff]
    %v1134 = vld [vmem:[#allocation3 + $0x80] sm:$0xff]
    %v1135 = vld [vmem:[#allocation3 + $0x88] sm:$0xff]
    %v1136 = vld [vmem:[#allocation3 + $0x90] sm:$0xff]
    %v1137 = vld [vmem:[#allocation3 + $0x98] sm:$0xff]
    %v1138 = vld [vmem:[#allocation3 + $0xa0] sm:$0xff]
    %v1139 = vld [vmem:[#allocation3 + $0xa8] sm:$0xff]
    %v1140 = vld [vmem:[#allocation3 + $0xb0] sm:$0xff]
    %v1141 = vld [vmem:[#allocation3 + $0xb8] sm:$0xff]
    %v1142 = vld [vmem:[#allocation3 + $0xc0] sm:$0xff]
    %v1143 = vld [vmem:[#allocation3 + $0xc8] sm:$0xff]
    %v1144 = vld [vmem:[#allocation3 + $0xd0] sm:$0xff]
    %v1145 = vld [vmem:[#allocation3 + $0xd8] sm:$0xff]
    %v1146 = vld [vmem:[#allocation3 + $0xe0] sm:$0xff]
    %v1147 = vld [vmem:[#allocation3 + $0xe8] sm:$0xff]
    %v1148 = vld [vmem:[#allocation3 + $0xf0] sm:$0xff]
    %v1149 = vld [vmem:[#allocation3 + $0xf8] sm:$0xff]
    %1150 = vmatprep.subr.bf16.mxu0 %v1119
    %1151 = vmatpush1.bf16.msra.mxu0 %v1118
    %1152 = vmatprep.subr.bf16.mxu0 %v1123
    %1153 = vmatpush1.bf16.msra.mxu0 %v1122
    %1154 = vmatprep.subr.bf16.mxu0 %v1127
    %1155 = vmatpush1.bf16.msra.mxu0 %v1126
    %1156 = vmatprep.subr.bf16.mxu0 %v1131
    %1157 = vmatpush1.bf16.msra.mxu0 %v1130
    %1158 = vmatprep.subr.bf16.mxu0 %v1135
    %1159 = vmatpush1.bf16.msra.mxu0 %v1134
    %1160 = vmatprep.subr.bf16.mxu0 %v1139
    %1161 = vmatpush1.bf16.msra.mxu0 %v1138
    %1162 = vmatprep.subr.bf16.mxu0 %v1143
    %1163 = vmatpush1.bf16.msra.mxu0 %v1142
    %1164 = vmatprep.subr.bf16.mxu0 %v1147
    %1165 = vmatpush1.bf16.msra.mxu0 %v1146
    %1166 = vmatprep.subr.bf16.mxu0 0
    %1167 = vmatpush1.bf16.msra.mxu0 0
    %1168 = vmatprep.subr.bf16.mxu0 0
    %1169 = vmatpush1.bf16.msra.mxu0 0
    %1170 = vmatprep.subr.bf16.mxu0 0
    %1171 = vmatpush1.bf16.msra.mxu0 0
    %1172 = vmatprep.subr.bf16.mxu0 0
    %1173 = vmatpush1.bf16.msra.mxu0 0
    %1174 = vmatprep.subr.bf16.mxu0 0
    %1175 = vmatpush1.bf16.msra.mxu0 0
    %1176 = vmatprep.subr.bf16.mxu0 0
    %1177 = vmatpush1.bf16.msra.mxu0 0
    %1178 = vmatprep.subr.bf16.mxu0 0
    %1179 = vmatpush1.bf16.msra.mxu0 0
    %1180 = vmatprep.subr.bf16.mxu0 0
    %1181 = vmatpush1.bf16.msra.mxu0 0
    %1182 = vmatprep.mubr.bf16.mxu0 0
    %1183 = vmatmul.mubr.bf16.gmra.mrb[0].mxu0 %v1117
    %v1184 = vpop.f32.mrb[0].mxu0
    %v1185 = vadd.f32 0.0, %v1184
    %v1186 = vpop.f32.mrb[0].mxu0
    %v1187 = vadd.f32 0.0, %v1186
    %v1188 = vpop.f32.mrb[0].mxu0
    %v1189 = vpop.f32.mrb[0].mxu0
    %1190 = vdwg.mxu0
    %1191 = vmatprep.subr.bf16.mxu0 %v1121
    %1192 = vmatpush1.bf16.msra.mxu0 %v1120
    %1193 = vmatprep.subr.bf16.mxu0 %v1125
    %1194 = vmatpush1.bf16.msra.mxu0 %v1124
    %1195 = vmatprep.subr.bf16.mxu0 %v1129
    %1196 = vmatpush1.bf16.msra.mxu0 %v1128
    %1197 = vmatprep.subr.bf16.mxu0 %v1133
    %1198 = vmatpush1.bf16.msra.mxu0 %v1132
    %1199 = vmatprep.subr.bf16.mxu0 %v1137
    %1200 = vmatpush1.bf16.msra.mxu0 %v1136
    %1201 = vmatprep.subr.bf16.mxu0 %v1141
    %1202 = vmatpush1.bf16.msra.mxu0 %v1140
    %1203 = vmatprep.subr.bf16.mxu0 %v1145
    %1204 = vmatpush1.bf16.msra.mxu0 %v1144
    %1205 = vmatprep.subr.bf16.mxu0 %v1149
    %1206 = vmatpush1.bf16.msra.mxu0 %v1148
    %1207 = vmatprep.subr.bf16.mxu0 0
    %1208 = vmatpush1.bf16.msra.mxu0 0
    %1209 = vmatprep.subr.bf16.mxu0 0
    %1210 = vmatpush1.bf16.msra.mxu0 0
    %1211 = vmatprep.subr.bf16.mxu0 0
    %1212 = vmatpush1.bf16.msra.mxu0 0
    %1213 = vmatprep.subr.bf16.mxu0 0
    %1214 = vmatpush1.bf16.msra.mxu0 0
    %1215 = vmatprep.subr.bf16.mxu0 0
    %1216 = vmatpush1.bf16.msra.mxu0 0
    %1217 = vmatprep.subr.bf16.mxu0 0
    %1218 = vmatpush1.bf16.msra.mxu0 0
    %1219 = vmatprep.subr.bf16.mxu0 0
    %1220 = vmatpush1.bf16.msra.mxu0 0
    %1221 = vmatprep.subr.bf16.mxu0 0
    %1222 = vmatpush1.bf16.msra.mxu0 0
    %1223 = vmatprep.mubr.bf16.mxu0 0
    %1224 = vmatmul.mubr.bf16.gmra.mrb[0].mxu0 %v1117
    %v1225 = vpop.f32.mrb[0].mxu0
    %v1226 = vadd.f32 0.0, %v1225
    %v1227 = vpop.f32.mrb[0].mxu0
    %v1228 = vadd.f32 0.0, %v1227
    %v1229 = vpop.f32.mrb[0].mxu0
    %v1230 = vpop.f32.mrb[0].mxu0
    %1231 = vdwg.mxu0
    %v1232 = vrot.slane %v1185, 4
    %v1233 = vadd.f32 %v1185, %v1232
    %v1234 = vrot.slane %v1233, 2
    %v1235 = vadd.f32 %v1233, %v1234
    %v1236 = vrot.slane %v1235, 1
    %v1237 = vadd.f32 %v1235, %v1236
    %v1238 = vrot.slane %v1187, 4
    %v1239 = vadd.f32 %v1187, %v1238
    %v1240 = vrot.slane %v1239, 2
    %v1241 = vadd.f32 %v1239, %v1240
    %v1242 = vrot.slane %v1241, 1
    %v1243 = vadd.f32 %v1241, %v1242
    %v1244 = vrot.slane %v1226, 4
    %v1245 = vadd.f32 %v1226, %v1244
    %v1246 = vrot.slane %v1245, 2
    %v1247 = vadd.f32 %v1245, %v1246
    %v1248 = vrot.slane %v1247, 1
    %v1249 = vadd.f32 %v1247, %v1248
    %v1250 = vrot.slane %v1228, 4
    %v1251 = vadd.f32 %v1228, %v1250
    %v1252 = vrot.slane %v1251, 2
    %v1253 = vadd.f32 %v1251, %v1252
    %v1254 = vrot.slane %v1253, 1
    %v1255 = vadd.f32 %v1253, %v1254
    %v1256 = vmul.f32 %v1237, %v770
    %v1257 = vmul.f32 %v1243, %v770
    %v1258 = vmul.f32 %v1249, %v770
    %v1259 = vmul.f32 %v1255, %v770
    %v1260 = vmul.f32 %v1185, %v1185
    %v1261 = vmul.f32 %v1187, %v1187
    %v1262 = vmul.f32 %v1226, %v1226
    %v1263 = vmul.f32 %v1228, %v1228
    %v1264 = vrot.slane %v1260, 4
    %v1265 = vadd.f32 %v1260, %v1264
    %v1266 = vrot.slane %v1265, 2
    %v1267 = vadd.f32 %v1265, %v1266
    %v1268 = vrot.slane %v1267, 1
    %v1269 = vadd.f32 %v1267, %v1268
    %v1270 = vrot.slane %v1261, 4
    %v1271 = vadd.f32 %v1261, %v1270
    %v1272 = vrot.slane %v1271, 2
    %v1273 = vadd.f32 %v1271, %v1272
    %v1274 = vrot.slane %v1273, 1
    %v1275 = vadd.f32 %v1273, %v1274
    %v1276 = vrot.slane %v1262, 4
    %v1277 = vadd.f32 %v1262, %v1276
    %v1278 = vrot.slane %v1277, 2
    %v1279 = vadd.f32 %v1277, %v1278
    %v1280 = vrot.slane %v1279, 1
    %v1281 = vadd.f32 %v1279, %v1280
    %v1282 = vrot.slane %v1263, 4
    %v1283 = vadd.f32 %v1263, %v1282
    %v1284 = vrot.slane %v1283, 2
    %v1285 = vadd.f32 %v1283, %v1284
    %v1286 = vrot.slane %v1285, 1
    %v1287 = vadd.f32 %v1285, %v1286
    %v1288 = vmul.f32 %v1269, %v770
    %v1289 = vmul.f32 %v1275, %v770
    %v1290 = vmul.f32 %v1281, %v770
    %v1291 = vmul.f32 %v1287, %v770
    %v1292 = vmul.f32 %v1256, %v1256
    %v1293 = vmul.f32 %v1257, %v1257
    %v1294 = vmul.f32 %v1258, %v1258
    %v1295 = vmul.f32 %v1259, %v1259
    %v1296 = vsub.f32 %v1288, %v1292
    %v1297 = vsub.f32 %v1289, %v1293
    %v1298 = vsub.f32 %v1290, %v1294
    %v1299 = vsub.f32 %v1291, %v1295
    %v1300 = vmax.f32 %v1296, 0.0
    %v1301 = vmax.f32 %v1297, 0.0
    %v1302 = vmax.f32 %v1298, 0.0
    %v1303 = vmax.f32 %v1299, 0.0
    %v1304 = vadd.f32 %v1300, 1e-05
    %v1305 = vadd.f32 %v1301, 1e-05
    %v1306 = vadd.f32 %v1302, 1e-05
    %v1307 = vadd.f32 %v1303, 1e-05
    %v1308 = vrsqrt.pop %v1304
    %v1309 = vrsqrt.pop %v1305
    %v1310 = vrsqrt.pop %v1306
    %v1311 = vrsqrt.pop %v1307
    %v1312 = vmul.f32 %v141, %v1308
    %v1313 = vmul.f32 %v142, %v1309
    %v1314 = vmul.f32 %v143, %v1310
    %v1315 = vmul.f32 %v144, %v1311
    %v1316 = vsub.f32 %v1185, %v1256
    %v1317 = vsub.f32 %v1187, %v1257
    %v1318 = vsub.f32 %v1226, %v1258
    %v1319 = vsub.f32 %v1228, %v1259
    %v1320 = vlaneseq
    %v1321 = vshrl.u32 %v1320, 7
    %v1322 = vsub.s32 6, %v1321
    %v1323 = vrot.slane %v1312, %v1322
    %v1324 = vlaneseq
    %v1325 = vshrl.u32 %v1324, 7
    %v1326 = vsub.s32 6, %v1325
    %v1327 = vrot.slane %v1313, %v1326
    %v1328 = vlaneseq
    %v1329 = vshrl.u32 %v1328, 7
    %v1330 = vsub.s32 6, %v1329
    %v1331 = vrot.slane %v1314, %v1330
    %v1332 = vlaneseq
    %v1333 = vshrl.u32 %v1332, 7
    %v1334 = vsub.s32 6, %v1333
    %v1335 = vrot.slane %v1315, %v1334
    %v1336 = vmul.f32 %v1316, %v1323
    %v1337 = vmul.f32 %v1317, %v1327
    %v1338 = vmul.f32 %v1318, %v1331
    %v1339 = vmul.f32 %v1319, %v1335
    %v1340 = vlaneseq
    %v1341 = vshrl.u32 %v1340, 7
    %v1342 = vsub.s32 7, %v1341
    %v1343 = vrot.slane %v141, %v1342
    %v1344 = vlaneseq
    %v1345 = vshrl.u32 %v1344, 7
    %v1346 = vsub.s32 7, %v1345
    %v1347 = vrot.slane %v142, %v1346
    %v1348 = vlaneseq
    %v1349 = vshrl.u32 %v1348, 7
    %v1350 = vsub.s32 7, %v1349
    %v1351 = vrot.slane %v143, %v1350
    %v1352 = vlaneseq
    %v1353 = vshrl.u32 %v1352, 7
    %v1354 = vsub.s32 7, %v1353
    %v1355 = vrot.slane %v144, %v1354
    %v1356 = vadd.f32 %v1336, %v1343
    %v1357 = vadd.f32 %v1337, %v1347
    %v1358 = vadd.f32 %v1338, %v1351
    %v1359 = vadd.f32 %v1339, %v1355
    %v1360 = vxor.u32 %v1356, 2147483648
    %v1361 = vxor.u32 %v1357, 2147483648
    %v1362 = vxor.u32 %v1358, 2147483648
    %v1363 = vxor.u32 %v1359, 2147483648
    %v1364 = vmul.f32 %v1360, 1.442695
    %v1365 = vpow.pop %v1364
    %v1366 = vmul.f32 %v1361, 1.442695
    %v1367 = vpow.pop %v1366
    %v1368 = vmul.f32 %v1362, 1.442695
    %v1369 = vpow.pop %v1368
    %v1370 = vmul.f32 %v1363, 1.442695
    %v1371 = vpow.pop %v1370
    %v1372 = vadd.f32 %v1365, 1.0
    %v1373 = vadd.f32 %v1367, 1.0
    %v1374 = vadd.f32 %v1369, 1.0
    %v1375 = vadd.f32 %v1371, 1.0
    %v1376 = vrcp.pop %v1372
    %v1377 = vmul.f32 1.0, %v1376
    %v1378 = vrcp.pop %v1373
    %v1379 = vmul.f32 1.0, %v1378
    %v1380 = vrcp.pop %v1374
    %v1381 = vmul.f32 1.0, %v1380
    %v1382 = vrcp.pop %v1375
    %v1383 = vmul.f32 1.0, %v1382
    %1384 = vst [vmem:[#allocation10] sm:$0xff] %v1377
    %1385 = vst [vmem:[#allocation10 + $0x8] sm:$0xff] %v1379
    %1386 = vst [vmem:[#allocation10 + $0x10] sm:$0xff] %v1381
    %1387 = vst [vmem:[#allocation10 + $0x18] sm:$0xff] %v1383
    // Predicated region
    $region60: #{global_dnn_9lifi_forward.1} parent=1 // pred_check
      _
    $region61: #{global_dnn_9lifi_forward.1} parent=1 // pred_check_branch
      %1389 = sbr.rel (0) target = $region63
    $region62: #{global_dnn_9lifi_forward.1} parent=1 // pred_region
      %s1391 = ssub.s32 512, 512
      %1392 = vsyncadd [#allocation7], %s1391
      %s1394 = sshll.u32 [#allocation10], 4
      %s1395 = int_to_ptr.vmem [resolvable:$true] %s1394
      %1397 = dma.vmem_to_hbm [thread:$0]  %s1395, 512, %s6, [#allocation7]
    $region63: #{global_dnn_9lifi_forward.1} parent=1 // pred_fallthru
      _
    // Predicated region
    $region64: #{global_dnn_9lifi_forward.1} parent=1 // pred_check
      _
    $region65: #{global_dnn_9lifi_forward.1} parent=1 // pred_check_branch
      %1399 = sbr.rel (0) target = $region67
    $region66: #{global_dnn_9lifi_forward.1} parent=1 // pred_region
      %1400 = dma.done [#allocation7], 512
    $region67: #{global_dnn_9lifi_forward.1} parent=1 // pred_fallthru
      _
    %1401 = vsyncpa [#allocation6], 1
    %1402 = vsyncpa [#allocation9], 1
    %1403 = vsyncpa [#allocation7], 1
  %1404 = vsyncmov [#allocation4]
  %s1405 = vpop.sfrf %1404
  %p1406 = scmp.eq.s32.totalorder %s1405, 0
  %p1407 = pneg %p1406
  %1409 = shalt.err (%p1407)
  %s1410 = scalar_lea.sflag [#allocation4], 1
  %1411 = vsyncmov %s1410
  %s1412 = vpop.sfrf %1411
  %p1413 = scmp.eq.s32.totalorder %s1412, 0
  %p1414 = pneg %p1413
  %1416 = shalt.err (%p1414)

</llo_original>
